<compile_context>
chip_gen: v7x
topology: tpu7x:2x2x1
jax: 0.10.0
libtpu: 0.0.40
codegen_flags: <defaults>
</compile_context>

<pallas_src>
import jax
import jax.numpy as jnp
from jax.experimental import pallas as pl
from jax.experimental.pallas import tpu as pltpu

BN_EPS = 1e-5
LANE = 128


def _round_up(x, m):
    return ((x + m - 1) // m) * m


# ------------------------------ Pallas kernels ------------------------------
def _matmul_stats_kernel(p_ref, w_ref, conv_ref, stats_ref):
    """Per M-tile:  conv = patches @ w  (bf16 x bf16 -> f32 MXU accumulate),
    plus per-tile partial BN statistics (sum, sum of squares) over tile rows."""
    conv = jnp.dot(p_ref[...], w_ref[...], preferred_element_type=jnp.float32)
    conv_ref[...] = conv
    cp = conv.shape[1]
    s = jnp.sum(conv, axis=0, keepdims=True)            # (1, Cp)
    sq = jnp.sum(conv * conv, axis=0, keepdims=True)    # (1, Cp)
    row = jax.lax.broadcasted_iota(jnp.int32, (8, cp), 0)
    stats = jnp.where(row == 0, s, jnp.where(row == 1, sq, 0.0))
    stats_ref[...] = stats.reshape(1, 8, cp)


def _bn_relu_kernel(conv_ref, scale_ref, shift_ref, out_ref):
    y = conv_ref[...] * scale_ref[...] + shift_ref[...]
    out_ref[...] = jnp.maximum(y, 0.0).astype(out_ref.dtype)


def _bn_add_relu_kernel(conv_ref, scale_ref, shift_ref, ident_ref, out_ref):
    y = conv_ref[...] * scale_ref[...] + shift_ref[...] + ident_ref[...]
    out_ref[...] = jnp.maximum(y, 0.0).astype(out_ref.dtype)


# --------------------------- pallas_call wrappers ----------------------------
def _compiler_params():
    return pltpu.CompilerParams(
        dimension_semantics=("parallel",),
        vmem_limit_bytes=64 * 1024 * 1024,
    )


def _conv_matmul_stats(patches, w, tm):
    """Tiled conv matmul + per-tile partial BN stats."""
    Mp, K = patches.shape
    Cp = w.shape[1]
    T = Mp // tm
    conv_out, stats = pl.pallas_call(
        _matmul_stats_kernel,
        out_shape=(
            jax.ShapeDtypeStruct((Mp, Cp), jnp.float32),
            jax.ShapeDtypeStruct((T, 8, Cp), jnp.float32),
        ),
        grid=(T,),
        in_specs=[
            pl.BlockSpec((tm, K), lambda i: (i, 0)),
            pl.BlockSpec((K, Cp), lambda i: (0, 0)),
        ],
        out_specs=(
            pl.BlockSpec((tm, Cp), lambda i: (i, 0)),
            pl.BlockSpec((1, 8, Cp), lambda i: (i, 0, 0)),
        ),
        compiler_params=_compiler_params(),
    )(patches, w)
    return conv_out, stats


def _bn_act(conv_out, scale, shift, identity, out_dtype, tm):
    """Tiled, mem-bound: normalize (+ optional residual) + ReLU."""
    Mp, Cp = conv_out.shape
    T = Mp // tm
    in_specs = [
        pl.BlockSpec((tm, Cp), lambda i: (i, 0)),
        pl.BlockSpec((1, Cp), lambda i: (0, 0)),
        pl.BlockSpec((1, Cp), lambda i: (0, 0)),
    ]
    if identity is None:
        kernel = _bn_relu_kernel
        args = (conv_out, scale, shift)
    else:
        kernel = _bn_add_relu_kernel
        in_specs = in_specs + [pl.BlockSpec((tm, Cp), lambda i: (i, 0))]
        args = (conv_out, scale, shift, identity)
    return pl.pallas_call(
        kernel,
        out_shape=jax.ShapeDtypeStruct((Mp, Cp), out_dtype),
        grid=(T,),
        in_specs=in_specs,
        out_specs=pl.BlockSpec((tm, Cp), lambda i: (i, 0)),
        compiler_params=_compiler_params(),
    )(*args)


# --------------------------------- glue --------------------------------------
def _im2col_3x3(x_nhwc):
    """3x3 / stride 1 / pad 1 im2col (XLA glue)."""
    N, H, W, C = x_nhwc.shape
    xp = jnp.pad(x_nhwc, ((0, 0), (1, 1), (1, 1), (0, 0)))
    cols = [xp[:, dy:dy + H, dx:dx + W, :] for dy in range(3) for dx in range(3)]
    return jnp.concatenate(cols, axis=-1).reshape(N * H * W, 9 * C)


def _w_oihw_to_im2col(w_oihw, c_pad):
    """PyTorch conv weight (O, I, kh, kw) -> (9*I, c_pad) matching im2col order."""
    O, I, KH, KW = w_oihw.shape
    w2d = jnp.transpose(w_oihw, (2, 3, 1, 0)).reshape(KH * KW * I, O)
    return jnp.pad(w2d, ((0, 0), (0, c_pad - O)))


def _bn_scale_shift(stats, m_true, gamma_p, beta_p):
    """Finalize two-pass BN: exact batch mean / biased variance from partials."""
    total = jnp.sum(stats, axis=0)                 # (8, Cp); rows 0,1 carry data
    mean = total[0] / m_true
    var = total[1] / m_true - mean * mean
    scale = gamma_p * jax.lax.rsqrt(var + BN_EPS)  # padded lanes: gamma=0 -> scale=0
    shift = beta_p - mean * scale
    return scale.reshape(1, -1), shift.reshape(1, -1)


def basic_block_forward(x_nchw, params, *, tm=256):
    """BasicBlock forward (stride=1, downsample=None => inplanes == planes)."""
    N, Cin, H, W = x_nchw.shape
    Cout = params["conv1_w"].shape[0]
    assert Cin == Cout, "no-downsample BasicBlock requires inplanes == planes"

    Cp = _round_up(Cout, LANE)          # lane-dense channel padding
    M = N * H * W
    Mp = _round_up(M, tm)

    x_nhwc = jnp.transpose(x_nchw, (0, 2, 3, 1)).astype(jnp.float32)

    # Per-channel BN params padded with zeros (padded lanes stay exactly 0).
    g1 = jnp.pad(params["bn1_g"].astype(jnp.float32), (0, Cp - Cout))
    b1 = jnp.pad(params["bn1_b"].astype(jnp.float32), (0, Cp - Cout))
    g2 = jnp.pad(params["bn2_g"].astype(jnp.float32), (0, Cp - Cout))
    b2 = jnp.pad(params["bn2_b"].astype(jnp.float32), (0, Cp - Cout))

    w1 = _w_oihw_to_im2col(params["conv1_w"], Cp).astype(jnp.bfloat16)
    w2 = _w_oihw_to_im2col(params["conv2_w"], Cp).astype(jnp.bfloat16)

    # ---- stage 1: conv1 -> bn1 -> relu (no residual, bf16 activations out) ----
    p1 = _im2col_3x3(x_nhwc).astype(jnp.bfloat16)
    p1 = jnp.pad(p1, ((0, Mp - M), (0, 0)))
    conv1, stats1 = _conv_matmul_stats(p1, w1, tm)
    s1, t1 = _bn_scale_shift(stats1, M, g1, b1)
    out1 = _bn_act(conv1, s1, t1, None, jnp.bfloat16, tm)          # (Mp, Cp) bf16

    # ---- stage 2: conv2 -> bn2 -> +identity -> relu ----
    out1_nhwc = out1[:M, :Cout].reshape(N, H, W, Cout)
    p2 = _im2col_3x3(out1_nhwc)                                    # bf16
    p2 = jnp.pad(p2, ((0, Mp - M), (0, 0)))
    conv2, stats2 = _conv_matmul_stats(p2, w2, tm)
    s2, t2 = _bn_scale_shift(stats2, M, g2, b2)
    identity = jnp.pad(x_nhwc.reshape(M, Cin), ((0, Mp - M), (0, Cp - Cin)))
    out2 = _bn_act(conv2, s2, t2, identity, jnp.float32, tm)       # (Mp, Cp) f32

    out = out2[:M, :Cout].reshape(N, H, W, Cout)
    return jnp.transpose(out, (0, 3, 1, 2))


# ---------------- pure-JAX reference (for correctness check) -----------------
def _ref_forward(x, params):
    def conv3x3(x, w):
        return jax.lax.conv_general_dilated(
            x, w, window_strides=(1, 1), padding=((1, 1), (1, 1)),
            dimension_numbers=("NCHW", "OIHW", "NCHW"))

    def bn(x, g, b):
        mean = jnp.mean(x, axis=(0, 2, 3), keepdims=True)
        var = jnp.mean((x - mean) ** 2, axis=(0, 2, 3), keepdims=True)
        return (x - mean) * jax.lax.rsqrt(var + BN_EPS) * g.reshape(1, -1, 1, 1) \
            + b.reshape(1, -1, 1, 1)

    out = jax.nn.relu(bn(conv3x3(x, params["conv1_w"]), params["bn1_g"], params["bn1_b"]))
    out = bn(conv3x3(out, params["conv2_w"]), params["bn2_g"], params["bn2_b"])
    return jax.nn.relu(out + x)


if __name__ == "__main__":
    N, C, H, W = 2, 4, 16, 16         # inplanes = planes = 4, stride = 1, no downsample
    key = jax.random.PRNGKey(0)
    k_x, k_w1, k_w2, k_g1, k_b1, k_g2, k_b2 = jax.random.split(key, 7)

    x = jax.random.normal(k_x, (N, C, H, W), dtype=jnp.float32)
    params = {
        "conv1_w": 0.1 * jax.random.normal(k_w1, (C, C, 3, 3), dtype=jnp.float32),
        "conv2_w": 0.1 * jax.random.normal(k_w2, (C, C, 3, 3), dtype=jnp.float32),
        "bn1_g": 1.0 + 0.1 * jax.random.normal(k_g1, (C,), dtype=jnp.float32),
        "bn1_b": 0.1 * jax.random.normal(k_b1, (C,), dtype=jnp.float32),
        "bn2_g": 1.0 + 0.1 * jax.random.normal(k_g2, (C,), dtype=jnp.float32),
        "bn2_b": 0.1 * jax.random.normal(k_b2, (C,), dtype=jnp.float32),
    }

    fwd = jax.jit(basic_block_forward)
    out = jax.block_until_ready(fwd(x, params))
    ref = jax.block_until_ready(_ref_forward(x, params))

    assert out.shape == (N, C, H, W), out.shape
    max_err = float(jnp.max(jnp.abs(out - ref)))
    # bf16 MXU operands (f32 accumulate/BN) => relaxed tolerance vs f32 reference.
    assert jnp.allclose(out, ref, atol=5e-2, rtol=5e-2), max_err
    print("KERNEL_OK")
</pallas_src>

<mosaic_0001>
module attributes {stable_mosaic.version = 11 : i64} {
  func.func @_matmul_stats_kernel(%arg0: i32, %arg1: memref<256x36xbf16, #tpu.memory_space<vmem>>, %arg2: memref<36x128xbf16, #tpu.memory_space<vmem>>, %arg3: memref<256x128xf32, #tpu.memory_space<vmem>>, %arg4: memref<1x8x128xf32, #tpu.memory_space<vmem>>) attributes {dimension_semantics = [#tpu.dimension_semantics<parallel>], iteration_bounds = array<i64: 2>, scalar_prefetch = 0 : i64, scratch_operands = 0 : i64, tpu.core_type = #tpu.core_type<tc>, window_params = [{transform_indices = @transform_0, window_bounds = array<i64: 256, 36>}, {pipeline_mode = #tpu.pipeline_mode<synchronous>, transform_indices = @transform_1, window_bounds = array<i64: 36, 128>}, {transform_indices = @transform_2, window_bounds = array<i64: 256, 128>}, {transform_indices = @transform_3, window_bounds = array<i64: 1, 8, 128>}]} {
    %c0 = arith.constant 0 : index
    %c0_0 = arith.constant 0 : index
    %0 = vector.load %arg1[%c0, %c0_0] : memref<256x36xbf16, #tpu.memory_space<vmem>>, vector<256x36xbf16>
    %c0_1 = arith.constant 0 : index
    %c0_2 = arith.constant 0 : index
    %1 = vector.load %arg2[%c0_1, %c0_2] : memref<36x128xbf16, #tpu.memory_space<vmem>>, vector<36x128xbf16>
    %cst = arith.constant dense<0.000000e+00> : vector<256x128xf32>
    %2 = tpu.matmul %0, %1, %cst {dimension_numbers = #tpu.dot_dimension_numbers<[1], [0], [0], [1], [0, 0, 1, 1], [], []>} : vector<256x36xbf16>, vector<36x128xbf16>, vector<256x128xf32> -> vector<256x128xf32>
    %c0_3 = arith.constant 0 : index
    %c0_4 = arith.constant 0 : index
    %3 = vector.load %arg3[%c0_3, %c0_4] : memref<256x128xf32, #tpu.memory_space<vmem>>, vector<256x128xf32>
    tpu.vector_store %arg3[%c0_3, %c0_4], %2 {strides = array<i32>} : memref<256x128xf32, #tpu.memory_space<vmem>>, vector<256x128xf32>,
    %cst_5 = arith.constant dense<0.000000e+00> : vector<128xf32>
    %4 = vector.multi_reduction <add>, %2, %cst_5 [0] : vector<256x128xf32> to vector<128xf32>
    %5 = vector.shape_cast %4 : vector<128xf32> to vector<1x128xf32>
    %6 = arith.mulf %2, %2 : vector<256x128xf32>
    %cst_6 = arith.constant dense<0.000000e+00> : vector<128xf32>
    %7 = vector.multi_reduction <add>, %6, %cst_6 [0] : vector<256x128xf32> to vector<128xf32>
    %8 = vector.shape_cast %7 : vector<128xf32> to vector<1x128xf32>
    %9 = tpu.iota {dimensions = array<i32: 0>} : vector<8x128xi32>
    %c0_i32 = arith.constant 0 : i32
    %10 = vector.broadcast %c0_i32 : i32 to vector<8x128xi32>
    %11 = arith.cmpi eq, %9, %10 : vector<8x128xi32>
    %c1_i32 = arith.constant 1 : i32
    %12 = vector.broadcast %c1_i32 : i32 to vector<8x128xi32>
    %13 = arith.cmpi eq, %9, %12 : vector<8x128xi32>
    %cst_7 = arith.constant 0.000000e+00 : f32
    %14 = vector.shape_cast %8 : vector<1x128xf32> to vector<1x128xf32>
    %15 = vector.broadcast %14 : vector<1x128xf32> to vector<8x128xf32>
    %16 = vector.broadcast %cst_7 : f32 to vector<8x128xf32>
    %17 = arith.select %13, %15, %16 : vector<8x128xi1>, vector<8x128xf32>
    %18 = vector.shape_cast %5 : vector<1x128xf32> to vector<1x128xf32>
    %19 = vector.broadcast %18 : vector<1x128xf32> to vector<8x128xf32>
    %20 = arith.select %11, %19, %17 : vector<8x128xi1>, vector<8x128xf32>
    %21 = vector.shape_cast %20 : vector<8x128xf32> to vector<1x8x128xf32>
    %c0_8 = arith.constant 0 : index
    %c0_9 = arith.constant 0 : index
    %c0_10 = arith.constant 0 : index
    %22 = vector.load %arg4[%c0_8, %c0_9, %c0_10] : memref<1x8x128xf32, #tpu.memory_space<vmem>>, vector<1x8x128xf32>
    tpu.vector_store %arg4[%c0_8, %c0_9, %c0_10], %21 {strides = array<i32>} : memref<1x8x128xf32, #tpu.memory_space<vmem>>, vector<1x8x128xf32>,
    return
  }
  func.func @transform_0(%arg0: i32) -> (i32, i32) {
    %c0_i32 = arith.constant 0 : i32
    %c0_i32_0 = arith.constant 0 : i32
    return %arg0, %c0_i32 : i32, i32
  }
  func.func @transform_1(%arg0: i32) -> (i32, i32) {
    %c0_i32 = arith.constant 0 : i32
    %c0_i32_0 = arith.constant 0 : i32
    %c0_i32_1 = arith.constant 0 : i32
    return %c0_i32, %c0_i32_0 : i32, i32
  }
  func.func @transform_2(%arg0: i32) -> (i32, i32) {
    %c0_i32 = arith.constant 0 : i32
    %c0_i32_0 = arith.constant 0 : i32
    return %arg0, %c0_i32 : i32, i32
  }
  func.func @transform_3(%arg0: i32) -> (i32, i32, i32) {
    %c0_i32 = arith.constant 0 : i32
    %c0_i32_0 = arith.constant 0 : i32
    %c0_i32_1 = arith.constant 0 : i32
    return %arg0, %c0_i32, %c0_i32_0 : i32, i32, i32
  }
}

module attributes {stable_mosaic.version = 11 : i64} {
  func.func @_bn_relu_kernel(%arg0: i32, %arg1: memref<256x128xf32, #tpu.memory_space<vmem>>, %arg2: memref<1x128xf32, #tpu.memory_space<vmem>>, %arg3: memref<1x128xf32, #tpu.memory_space<vmem>>, %arg4: memref<256x128xbf16, #tpu.memory_space<vmem>>) attributes {dimension_semantics = [#tpu.dimension_semantics<parallel>], iteration_bounds = array<i64: 2>, scalar_prefetch = 0 : i64, scratch_operands = 0 : i64, tpu.core_type = #tpu.core_type<tc>, window_params = [{transform_indices = @transform_0, window_bounds = array<i64: 256, 128>}, {pipeline_mode = #tpu.pipeline_mode<synchronous>, transform_indices = @transform_1, window_bounds = array<i64: 1, 128>}, {pipeline_mode = #tpu.pipeline_mode<synchronous>, transform_indices = @transform_2, window_bounds = array<i64: 1, 128>}, {transform_indices = @transform_3, window_bounds = array<i64: 256, 128>}]} {
    %c0 = arith.constant 0 : index
    %c0_0 = arith.constant 0 : index
    %0 = vector.load %arg1[%c0, %c0_0] : memref<256x128xf32, #tpu.memory_space<vmem>>, vector<256x128xf32>
    %c0_1 = arith.constant 0 : index
    %c0_2 = arith.constant 0 : index
    %1 = vector.load %arg2[%c0_1, %c0_2] : memref<1x128xf32, #tpu.memory_space<vmem>>, vector<1x128xf32>
    %2 = vector.broadcast %1 : vector<1x128xf32> to vector<256x128xf32>
    %3 = arith.mulf %0, %2 : vector<256x128xf32>
    %c0_3 = arith.constant 0 : index
    %c0_4 = arith.constant 0 : index
    %4 = vector.load %arg3[%c0_3, %c0_4] : memref<1x128xf32, #tpu.memory_space<vmem>>, vector<1x128xf32>
    %5 = vector.broadcast %4 : vector<1x128xf32> to vector<256x128xf32>
    %6 = arith.addf %3, %5 : vector<256x128xf32>
    %cst = arith.constant 0.000000e+00 : f32
    %7 = vector.broadcast %cst : f32 to vector<256x128xf32>
    %8 = arith.maximumf %6, %7 : vector<256x128xf32>
    %9 = arith.truncf %8 : vector<256x128xf32> to vector<256x128xbf16>
    %c0_5 = arith.constant 0 : index
    %c0_6 = arith.constant 0 : index
    %10 = vector.load %arg4[%c0_5, %c0_6] : memref<256x128xbf16, #tpu.memory_space<vmem>>, vector<256x128xbf16>
    tpu.vector_store %arg4[%c0_5, %c0_6], %9 {strides = array<i32>} : memref<256x128xbf16, #tpu.memory_space<vmem>>, vector<256x128xbf16>,
    return
  }
  func.func @transform_0(%arg0: i32) -> (i32, i32) {
    %c0_i32 = arith.constant 0 : i32
    %c0_i32_0 = arith.constant 0 : i32
    return %arg0, %c0_i32 : i32, i32
  }
  func.func @transform_1(%arg0: i32) -> (i32, i32) {
    %c0_i32 = arith.constant 0 : i32
    %c0_i32_0 = arith.constant 0 : i32
    %c0_i32_1 = arith.constant 0 : i32
    return %c0_i32, %c0_i32_0 : i32, i32
  }
  func.func @transform_2(%arg0: i32) -> (i32, i32) {
    %c0_i32 = arith.constant 0 : i32
    %c0_i32_0 = arith.constant 0 : i32
    %c0_i32_1 = arith.constant 0 : i32
    return %c0_i32, %c0_i32_0 : i32, i32
  }
  func.func @transform_3(%arg0: i32) -> (i32, i32) {
    %c0_i32 = arith.constant 0 : i32
    %c0_i32_0 = arith.constant 0 : i32
    return %arg0, %c0_i32 : i32, i32
  }
}

module attributes {stable_mosaic.version = 11 : i64} {
  func.func @_bn_add_relu_kernel(%arg0: i32, %arg1: memref<256x128xf32, #tpu.memory_space<vmem>>, %arg2: memref<1x128xf32, #tpu.memory_space<vmem>>, %arg3: memref<1x128xf32, #tpu.memory_space<vmem>>, %arg4: memref<256x128xf32, #tpu.memory_space<vmem>>, %arg5: memref<256x128xf32, #tpu.memory_space<vmem>>) attributes {dimension_semantics = [#tpu.dimension_semantics<parallel>], iteration_bounds = array<i64: 2>, scalar_prefetch = 0 : i64, scratch_operands = 0 : i64, tpu.core_type = #tpu.core_type<tc>, window_params = [{transform_indices = @transform_0, window_bounds = array<i64: 256, 128>}, {pipeline_mode = #tpu.pipeline_mode<synchronous>, transform_indices = @transform_1, window_bounds = array<i64: 1, 128>}, {pipeline_mode = #tpu.pipeline_mode<synchronous>, transform_indices = @transform_2, window_bounds = array<i64: 1, 128>}, {transform_indices = @transform_3, window_bounds = array<i64: 256, 128>}, {transform_indices = @transform_4, window_bounds = array<i64: 256, 128>}]} {
    %c0 = arith.constant 0 : index
    %c0_0 = arith.constant 0 : index
    %0 = vector.load %arg1[%c0, %c0_0] : memref<256x128xf32, #tpu.memory_space<vmem>>, vector<256x128xf32>
    %c0_1 = arith.constant 0 : index
    %c0_2 = arith.constant 0 : index
    %1 = vector.load %arg2[%c0_1, %c0_2] : memref<1x128xf32, #tpu.memory_space<vmem>>, vector<1x128xf32>
    %2 = vector.broadcast %1 : vector<1x128xf32> to vector<256x128xf32>
    %3 = arith.mulf %0, %2 : vector<256x128xf32>
    %c0_3 = arith.constant 0 : index
    %c0_4 = arith.constant 0 : index
    %4 = vector.load %arg3[%c0_3, %c0_4] : memref<1x128xf32, #tpu.memory_space<vmem>>, vector<1x128xf32>
    %5 = vector.broadcast %4 : vector<1x128xf32> to vector<256x128xf32>
    %6 = arith.addf %3, %5 : vector<256x128xf32>
    %c0_5 = arith.constant 0 : index
    %c0_6 = arith.constant 0 : index
    %7 = vector.load %arg4[%c0_5, %c0_6] : memref<256x128xf32, #tpu.memory_space<vmem>>, vector<256x128xf32>
    %8 = arith.addf %6, %7 : vector<256x128xf32>
    %cst = arith.constant 0.000000e+00 : f32
    %9 = vector.broadcast %cst : f32 to vector<256x128xf32>
    %10 = arith.maximumf %8, %9 : vector<256x128xf32>
    %c0_7 = arith.constant 0 : index
    %c0_8 = arith.constant 0 : index
    %11 = vector.load %arg5[%c0_7, %c0_8] : memref<256x128xf32, #tpu.memory_space<vmem>>, vector<256x128xf32>
    tpu.vector_store %arg5[%c0_7, %c0_8], %10 {strides = array<i32>} : memref<256x128xf32, #tpu.memory_space<vmem>>, vector<256x128xf32>,
    return
  }
  func.func @transform_0(%arg0: i32) -> (i32, i32) {
    %c0_i32 = arith.constant 0 : i32
    %c0_i32_0 = arith.constant 0 : i32
    return %arg0, %c0_i32 : i32, i32
  }
  func.func @transform_1(%arg0: i32) -> (i32, i32) {
    %c0_i32 = arith.constant 0 : i32
    %c0_i32_0 = arith.constant 0 : i32
    %c0_i32_1 = arith.constant 0 : i32
    return %c0_i32, %c0_i32_0 : i32, i32
  }
  func.func @transform_2(%arg0: i32) -> (i32, i32) {
    %c0_i32 = arith.constant 0 : i32
    %c0_i32_0 = arith.constant 0 : i32
    %c0_i32_1 = arith.constant 0 : i32
    return %c0_i32, %c0_i32_0 : i32, i32
  }
  func.func @transform_3(%arg0: i32) -> (i32, i32) {
    %c0_i32 = arith.constant 0 : i32
    %c0_i32_0 = arith.constant 0 : i32
    return %arg0, %c0_i32 : i32, i32
  }
  func.func @transform_4(%arg0: i32) -> (i32, i32) {
    %c0_i32 = arith.constant 0 : i32
    %c0_i32_0 = arith.constant 0 : i32
    return %arg0, %c0_i32 : i32, i32
  }
}

</mosaic_0001>

<llo_original>
// kernel: basic_block_forward.5
$region0: #{basic_block_forward.5}
  #allocation0 [shape = 'u32[]', space=smem, size = 0x4, offset = 0x4, fixed_abs, tag = 'smem constant byte address 0x4 - core index']
  #allocation1 [shape = 'u32[144,128]{1,0:T(1,128)}', space=vmem, size = 0x12000, scoped, tag = 'internal scratch']
  %s0 = inlined_call_operand.hbm [shape: f32[512,128], index: 0, kind: input, shape index: {}]
  %s1 = inlined_call_operand.hbm [shape: f32[1,128], index: 1, kind: input, shape index: {}]
  %s2 = inlined_call_operand.hbm [shape: f32[1,128], index: 2, kind: input, shape index: {}]
  %s3 = inlined_call_operand.hbm [shape: bf16[512,128], index: 3, kind: output, shape index: {}]
  %s4 = sld [smem:[#allocation0]]
  $region57: #{basic_block_forward.5} parent=0
    _
  %s6 = ssub.s32 1, %s4
  %s7 = scalar_select 0, %s6, %s4
  $region1: #{basic_block_forward.5} parent=0
    #allocation2 [shape = 'u8[262144]{0}', space=vmem, size = 0x40000, scoped, tag = 'input window, operand 0']
    #allocation3 [shape = 's32[2]{0}', space=sflag, size = 0x8, scoped, tag = 'scoped memory for basic_block_forward.5']
    #allocation4 [shape = 's32[2]{0}', space=sflag, size = 0x8, scoped, tag = 'scoped memory for basic_block_forward.5']
    #allocation5 [shape = 'u8[512]{0}', space=vmem, size = 0x400, scoped, tag = 'input window, operand 1, single buffered']
    #allocation6 [shape = 's32[1]{0}', space=sflag, size = 0x4, scoped, tag = 'scoped memory for basic_block_forward.5']
    #allocation7 [shape = 'u8[512]{0}', space=vmem, size = 0x400, scoped, tag = 'input window, operand 2, single buffered']
    #allocation8 [shape = 'u8[131072]{0}', space=vmem, size = 0x20000, scoped, tag = 'output window, operand 0']
    %8 = vsyncpa [#allocation3], 0
    %s9 = scalar_lea.sflag [#allocation3], 1
    %10 = vsyncpa %s9, 0
    %11 = vsyncpa [#allocation6], 0
    %12 = vsyncpa [#allocation4], 0
    %s13 = scalar_lea.sflag [#allocation4], 1
    %14 = vsyncpa %s13, 0
    loop: start=0, step=1, limit=4
    $region2: #{basic_block_forward.5} parent=1 // loop_pre_header
      _
    $region3: #{basic_block_forward.5} parent=1 // loop_header
      %s16 = sphi 0, %s20
      %p17 = scmp.ge.s32.totalorder %s16, 4
      %s26 = sphi 0, %s28
      %s29 = sphi 0, %s26
      %s30 = sphi 0, %s29
      %s46 = sphi 0, %s30
      %s50 = sphi 0, %s50
      %s52 = sphi 0, %s50
      %s53 = sphi 0, %s52
      %s67 = sphi 0, %s53
      %s71 = sphi 0, %s71
      %s73 = sphi 0, %s71
      %s74 = sphi 0, %s73
      %s88 = sphi 0, %s74
      %s94 = sphi 0, %s96
      %s97 = sphi 0, %s94
      %s98 = sphi 0, %s97
      %s114 = sphi 0, %s98
    $region4: #{basic_block_forward.5} parent=1 // loop_header_branch
      %19 = sbr.rel (%p17) target = $region8
    $region5: #{basic_block_forward.5} parent=1 // loop_body
      %s21 = ssub.s32 %s16, 1
      %s22 = ssub.s32 %s16, 2
      %s23 = sadd.s32 %s16, 1
      %s24 = ssub.s32 %s16, %s23
      %p25 = scmp.eq.s32.totalorder %s24, 0
      %s27 = sadd.s32 %s26, 1
      %s28 = scalar_select %p25, %s26, %s27
      %p31 = pneg %p25
      %p32 = scmp.eq.s32.totalorder %s16, 1
      %p33 = por %p31, %p32
      %p34 = scmp.ne.s32.totalorder %s26, %s29
      %p35 = scmp.eq.s32.totalorder %s16, 0
      %p36 = por %p34, %p35
      %p37 = scmp.ne.s32.totalorder %s26, %s29
      %p38 = scmp.eq.s32.totalorder %s21, 1
      %p39 = por %p37, %p38
      %p40 = scmp.ne.s32.totalorder %s29, %s30
      %p41 = scmp.eq.s32.totalorder %s21, 0
      %p42 = por %p40, %p41
      %p43 = scmp.ne.s32.totalorder %s29, %s30
      %p44 = scmp.eq.s32.totalorder %s22, 1
      %p45 = por %p43, %p44
      %p47 = scmp.ne.s32.totalorder %s30, %s46
      %p48 = scmp.eq.s32.totalorder %s22, 0
      %p49 = por %p47, %p48
      %s51 = sadd.s32 %s50, 1
      %p54 = scmp.eq.s32.totalorder %s16, 1
      %p55 = scmp.ne.s32.totalorder %s50, %s52
      %p56 = scmp.eq.s32.totalorder %s16, 0
      %p57 = por %p55, %p56
      %p58 = scmp.ne.s32.totalorder %s50, %s52
      %p59 = scmp.eq.s32.totalorder %s21, 1
      %p60 = por %p58, %p59
      %p61 = scmp.ne.s32.totalorder %s52, %s53
      %p62 = scmp.eq.s32.totalorder %s21, 0
      %p63 = por %p61, %p62
      %p64 = scmp.ne.s32.totalorder %s52, %s53
      %p65 = scmp.eq.s32.totalorder %s22, 1
      %p66 = por %p64, %p65
      %p68 = scmp.ne.s32.totalorder %s53, %s67
      %p69 = scmp.eq.s32.totalorder %s22, 0
      %p70 = por %p68, %p69
      %s72 = sadd.s32 %s71, 1
      %p75 = scmp.eq.s32.totalorder %s16, 1
      %p76 = scmp.ne.s32.totalorder %s71, %s73
      %p77 = scmp.eq.s32.totalorder %s16, 0
      %p78 = por %p76, %p77
      %p79 = scmp.ne.s32.totalorder %s71, %s73
      %p80 = scmp.eq.s32.totalorder %s21, 1
      %p81 = por %p79, %p80
      %p82 = scmp.ne.s32.totalorder %s73, %s74
      %p83 = scmp.eq.s32.totalorder %s21, 0
      %p84 = por %p82, %p83
      %p85 = scmp.ne.s32.totalorder %s73, %s74
      %p86 = scmp.eq.s32.totalorder %s22, 1
      %p87 = por %p85, %p86
      %p89 = scmp.ne.s32.totalorder %s74, %s88
      %p90 = scmp.eq.s32.totalorder %s22, 0
      %p91 = por %p89, %p90
      %s92 = ssub.s32 %s16, %s23
      %p93 = scmp.eq.s32.totalorder %s92, 0
      %s95 = sadd.s32 %s94, 1
      %s96 = scalar_select %p93, %s94, %s95
      %p99 = pneg %p93
      %p100 = scmp.eq.s32.totalorder %s16, 1
      %p101 = por %p99, %p100
      %p102 = scmp.ne.s32.totalorder %s94, %s97
      %p103 = scmp.eq.s32.totalorder %s16, 0
      %p104 = por %p102, %p103
      %p105 = scmp.ne.s32.totalorder %s94, %s97
      %p106 = scmp.eq.s32.totalorder %s21, 1
      %p107 = por %p105, %p106
      %p108 = scmp.ne.s32.totalorder %s97, %s98
      %p109 = scmp.eq.s32.totalorder %s21, 0
      %p110 = por %p108, %p109
      %p111 = scmp.ne.s32.totalorder %s97, %s98
      %p112 = scmp.eq.s32.totalorder %s22, 1
      %p113 = por %p111, %p112
      %p115 = scmp.ne.s32.totalorder %s98, %s114
      %p116 = scmp.eq.s32.totalorder %s22, 0
      %p117 = por %p115, %p116
      %p118 = scmp.le.s32.totalorder 1, %s16
      %p119 = scmp.lt.s32.totalorder %s16, 3
      %p120 = pnand %p118, %p119
      %p121 = pneg %p120
      // Predicated region
      $region9: #{basic_block_forward.5} parent=5 // pred_check
        _
      $region10: #{basic_block_forward.5} parent=5 // pred_check_branch
        %123 = sbr.rel (%p120) target = $region12
      $region11: #{basic_block_forward.5} parent=5 // pred_region
        %s124 = ssub.s32 %s16, 1
        // Predicated region
        $region13: #{basic_block_forward.5} parent=11 // pred_check
          %p125 = pneg %p63
        $region14: #{basic_block_forward.5} parent=11 // pred_check_branch
          %127 = sbr.rel (%p125) target = $region16
        $region15: #{basic_block_forward.5} parent=11 // pred_region
          %s129 = ssub.s32 16, 16
          %130 = vsyncadd [#allocation6], %s129
          %s132 = sshll.u32 [#allocation5], 4
          %s133 = int_to_ptr.vmem [resolvable:$true] %s132
          %135 = dma.hbm_to_vmem [thread:$0]  %s1, 16, %s133, [#allocation6]
        $region16: #{basic_block_forward.5} parent=11 // pred_fallthru
          _
        // Predicated region
        $region17: #{basic_block_forward.5} parent=11 // pred_check
          %p136 = pneg %p84
        $region18: #{basic_block_forward.5} parent=11 // pred_check_branch
          %138 = sbr.rel (%p136) target = $region20
        $region19: #{basic_block_forward.5} parent=11 // pred_region
          %s140 = ssub.s32 16, 16
          %141 = vsyncadd [#allocation6], %s140
          %s143 = sshll.u32 [#allocation7], 4
          %s144 = int_to_ptr.vmem [resolvable:$true] %s143
          %146 = dma.hbm_to_vmem [thread:$0]  %s2, 16, %s144, [#allocation6]
        $region20: #{basic_block_forward.5} parent=11 // pred_fallthru
          _
      $region12: #{basic_block_forward.5} parent=5 // pred_fallthru
        _
      %p147 = scmp.lt.s32.totalorder %s16, 2
      // Predicated region
      $region21: #{basic_block_forward.5} parent=5 // pred_check
        %p148 = pneg %p147
      $region22: #{basic_block_forward.5} parent=5 // pred_check_branch
        %150 = sbr.rel (%p148) target = $region24
      $region23: #{basic_block_forward.5} parent=5 // pred_region
        // Predicated region
        $region25: #{basic_block_forward.5} parent=23 // pred_check
          %p151 = pneg %p36
        $region26: #{basic_block_forward.5} parent=23 // pred_check_branch
          %153 = sbr.rel (%p151) target = $region28
        $region27: #{basic_block_forward.5} parent=23 // pred_region
          %s154 = sand.u32 %s26, 1
          %s155 = scalar_lea.sflag [#allocation3], %s154
          %s156 = sand.u32 %s26, 1
          %s157 = smul.addr %s156, 256
          %s158 = scalar_lea.vmem [#allocation2], %s157
          %s159 = smul.u32 32, %s16
          %s161 = ssub.s32 4096, 4096
          %162 = vsyncadd %s155, %s161
          %s163 = smul.addr %s159, 128
          %s164 = scalar_lea.hbm %s0, %s163
          %s165 = sshll.u32 %s158, 4
          %s166 = int_to_ptr.vmem [resolvable:$true] %s165
          %171 = dma.hbm_to_vmem [thread:$0]  %s164, 4096, %s166, %s155, 128, 128, 8
        $region28: #{basic_block_forward.5} parent=23 // pred_fallthru
          _
      $region24: #{basic_block_forward.5} parent=5 // pred_fallthru
        _
      %p172 = scmp.le.s32.totalorder 1, %s16
      %p173 = scmp.lt.s32.totalorder %s16, 3
      %p174 = pnand %p172, %p173
      %p175 = pneg %p174
      // Predicated region
      $region29: #{basic_block_forward.5} parent=5 // pred_check
        _
      $region30: #{basic_block_forward.5} parent=5 // pred_check_branch
        %177 = sbr.rel (%p174) target = $region32
      $region31: #{basic_block_forward.5} parent=5 // pred_region
        %s178 = ssub.s32 %s16, 1
        %s179 = sand.u32 %s29, 1
        %s180 = scalar_lea.sflag [#allocation3], %s179
        %s181 = sand.u32 %s29, 1
        %s182 = smul.addr %s181, 256
        %s183 = scalar_lea.vmem [#allocation2], %s182
        // Predicated region
        $region33: #{basic_block_forward.5} parent=31 // pred_check
          %p184 = pneg %p42
        $region34: #{basic_block_forward.5} parent=31 // pred_check_branch
          %186 = sbr.rel (%p184) target = $region36
        $region35: #{basic_block_forward.5} parent=31 // pred_region
          %187 = dma.done %s180, 4096
        $region36: #{basic_block_forward.5} parent=31 // pred_fallthru
          _
        // Predicated region
        $region37: #{basic_block_forward.5} parent=31 // pred_check
          %p188 = pneg %p63
        $region38: #{basic_block_forward.5} parent=31 // pred_check_branch
          %190 = sbr.rel (%p188) target = $region40
        $region39: #{basic_block_forward.5} parent=31 // pred_region
          %191 = dma.done [#allocation6], 16
        $region40: #{basic_block_forward.5} parent=31 // pred_fallthru
          _
        // Predicated region
        $region41: #{basic_block_forward.5} parent=31 // pred_check
          %p192 = pneg %p84
        $region42: #{basic_block_forward.5} parent=31 // pred_check_branch
          %194 = sbr.rel (%p192) target = $region44
        $region43: #{basic_block_forward.5} parent=31 // pred_region
          %195 = dma.done [#allocation6], 16
        $region44: #{basic_block_forward.5} parent=31 // pred_fallthru
          _
        %s196 = sand.u32 %s29, 1
        %s197 = scalar_lea.sflag [#allocation3], %s196
        %s198 = sand.u32 %s29, 1
        %s199 = smul.addr %s198, 256
        %s200 = scalar_lea.vmem [#allocation2], %s199
        %p201 = pneg %p42
        %p202 = pneg %p39
        %p203 = pneg %p63
        %p204 = pneg %p60
        %p205 = pneg %p84
        %p206 = pneg %p81
        %p207 = pneg %p110
        %p208 = pneg %p107
        %s209 = sand.u32 %s97, 1
        %s210 = scalar_lea.sflag [#allocation4], %s209
        %s211 = sand.u32 %s97, 1
        %s212 = smul.addr %s211, 128
        %s213 = scalar_lea.vmem [#allocation8], %s212
        %s214 = smul.u32 32, %s21
        %s215 = smul.u32 32, %s21
        %v216 = vld [vmem:[%s183] sm:$0xff]
        %v217 = vld [vmem:[%s183 + $0x8] sm:$0xff]
        %v218 = vld [vmem:[%s183 + $0x10] sm:$0xff]
        %v219 = vld [vmem:[%s183 + $0x18] sm:$0xff]
        %v220 = vld [vmem:[%s183 + $0x20] sm:$0xff]
        %v221 = vld [vmem:[%s183 + $0x28] sm:$0xff]
        %v222 = vld [vmem:[%s183 + $0x30] sm:$0xff]
        %v223 = vld [vmem:[%s183 + $0x38] sm:$0xff]
        %v224 = vld [vmem:[%s183 + $0x40] sm:$0xff]
        %v225 = vld [vmem:[%s183 + $0x48] sm:$0xff]
        %v226 = vld [vmem:[%s183 + $0x50] sm:$0xff]
        %v227 = vld [vmem:[%s183 + $0x58] sm:$0xff]
        %v228 = vld [vmem:[%s183 + $0x60] sm:$0xff]
        %v229 = vld [vmem:[%s183 + $0x68] sm:$0xff]
        %v230 = vld [vmem:[%s183 + $0x70] sm:$0xff]
        %v231 = vld [vmem:[%s183 + $0x78] sm:$0xff]
        %v232 = vld [vmem:[%s183 + $0x80] sm:$0xff]
        %v233 = vld [vmem:[%s183 + $0x88] sm:$0xff]
        %v234 = vld [vmem:[%s183 + $0x90] sm:$0xff]
        %v235 = vld [vmem:[%s183 + $0x98] sm:$0xff]
        %v236 = vld [vmem:[%s183 + $0xa0] sm:$0xff]
        %v237 = vld [vmem:[%s183 + $0xa8] sm:$0xff]
        %v238 = vld [vmem:[%s183 + $0xb0] sm:$0xff]
        %v239 = vld [vmem:[%s183 + $0xb8] sm:$0xff]
        %v240 = vld [vmem:[%s183 + $0xc0] sm:$0xff]
        %v241 = vld [vmem:[%s183 + $0xc8] sm:$0xff]
        %v242 = vld [vmem:[%s183 + $0xd0] sm:$0xff]
        %v243 = vld [vmem:[%s183 + $0xd8] sm:$0xff]
        %v244 = vld [vmem:[%s183 + $0xe0] sm:$0xff]
        %v245 = vld [vmem:[%s183 + $0xe8] sm:$0xff]
        %v246 = vld [vmem:[%s183 + $0xf0] sm:$0xff]
        %v247 = vld [vmem:[%s183 + $0xf8] sm:$0xff]
        %v248 = vld [vmem:[#allocation5] sm:$0x1]
        %v250 = vlaneseq
        %v251 = vshrl.u32 %v250, 7
        %v252 = vsub.s32 0, %v251
        %v253 = vrot.slane %v248, %v252
        %v255 = vmul.f32 %v216, %v253
        %v256 = vmul.f32 %v217, %v253
        %v257 = vmul.f32 %v218, %v253
        %v258 = vmul.f32 %v219, %v253
        %v259 = vmul.f32 %v220, %v253
        %v260 = vmul.f32 %v221, %v253
        %v261 = vmul.f32 %v222, %v253
        %v262 = vmul.f32 %v223, %v253
        %v263 = vmul.f32 %v224, %v253
        %v264 = vmul.f32 %v225, %v253
        %v265 = vmul.f32 %v226, %v253
        %v266 = vmul.f32 %v227, %v253
        %v267 = vmul.f32 %v228, %v253
        %v268 = vmul.f32 %v229, %v253
        %v269 = vmul.f32 %v230, %v253
        %v270 = vmul.f32 %v231, %v253
        %v271 = vmul.f32 %v232, %v253
        %v272 = vmul.f32 %v233, %v253
        %v273 = vmul.f32 %v234, %v253
        %v274 = vmul.f32 %v235, %v253
        %v275 = vmul.f32 %v236, %v253
        %v276 = vmul.f32 %v237, %v253
        %v277 = vmul.f32 %v238, %v253
        %v278 = vmul.f32 %v239, %v253
        %v279 = vmul.f32 %v240, %v253
        %v280 = vmul.f32 %v241, %v253
        %v281 = vmul.f32 %v242, %v253
        %v282 = vmul.f32 %v243, %v253
        %v283 = vmul.f32 %v244, %v253
        %v284 = vmul.f32 %v245, %v253
        %v285 = vmul.f32 %v246, %v253
        %v286 = vmul.f32 %v247, %v253
        %v287 = vld [vmem:[#allocation7] sm:$0x1]
        %v289 = vlaneseq
        %v290 = vshrl.u32 %v289, 7
        %v291 = vsub.s32 0, %v290
        %v292 = vrot.slane %v287, %v291
        %v294 = vadd.f32 %v255, %v292
        %v295 = vadd.f32 %v256, %v292
        %v296 = vadd.f32 %v257, %v292
        %v297 = vadd.f32 %v258, %v292
        %v298 = vadd.f32 %v259, %v292
        %v299 = vadd.f32 %v260, %v292
        %v300 = vadd.f32 %v261, %v292
        %v301 = vadd.f32 %v262, %v292
        %v302 = vadd.f32 %v263, %v292
        %v303 = vadd.f32 %v264, %v292
        %v304 = vadd.f32 %v265, %v292
        %v305 = vadd.f32 %v266, %v292
        %v306 = vadd.f32 %v267, %v292
        %v307 = vadd.f32 %v268, %v292
        %v308 = vadd.f32 %v269, %v292
        %v309 = vadd.f32 %v270, %v292
        %v310 = vadd.f32 %v271, %v292
        %v311 = vadd.f32 %v272, %v292
        %v312 = vadd.f32 %v273, %v292
        %v313 = vadd.f32 %v274, %v292
        %v314 = vadd.f32 %v275, %v292
        %v315 = vadd.f32 %v276, %v292
        %v316 = vadd.f32 %v277, %v292
        %v317 = vadd.f32 %v278, %v292
        %v318 = vadd.f32 %v279, %v292
        %v319 = vadd.f32 %v280, %v292
        %v320 = vadd.f32 %v281, %v292
        %v321 = vadd.f32 %v282, %v292
        %v322 = vadd.f32 %v283, %v292
        %v323 = vadd.f32 %v284, %v292
        %v324 = vadd.f32 %v285, %v292
        %v325 = vadd.f32 %v286, %v292
        %v326 = vmax.f32 %v294, 0.0
        %v327 = vmax.f32 %v295, 0.0
        %v328 = vmax.f32 %v296, 0.0
        %v329 = vmax.f32 %v297, 0.0
        %v330 = vmax.f32 %v298, 0.0
        %v331 = vmax.f32 %v299, 0.0
        %v332 = vmax.f32 %v300, 0.0
        %v333 = vmax.f32 %v301, 0.0
        %v334 = vmax.f32 %v302, 0.0
        %v335 = vmax.f32 %v303, 0.0
        %v336 = vmax.f32 %v304, 0.0
        %v337 = vmax.f32 %v305, 0.0
        %v338 = vmax.f32 %v306, 0.0
        %v339 = vmax.f32 %v307, 0.0
        %v340 = vmax.f32 %v308, 0.0
        %v341 = vmax.f32 %v309, 0.0
        %v342 = vmax.f32 %v310, 0.0
        %v343 = vmax.f32 %v311, 0.0
        %v344 = vmax.f32 %v312, 0.0
        %v345 = vmax.f32 %v313, 0.0
        %v346 = vmax.f32 %v314, 0.0
        %v347 = vmax.f32 %v315, 0.0
        %v348 = vmax.f32 %v316, 0.0
        %v349 = vmax.f32 %v317, 0.0
        %v350 = vmax.f32 %v318, 0.0
        %v351 = vmax.f32 %v319, 0.0
        %v352 = vmax.f32 %v320, 0.0
        %v353 = vmax.f32 %v321, 0.0
        %v354 = vmax.f32 %v322, 0.0
        %v355 = vmax.f32 %v323, 0.0
        %v356 = vmax.f32 %v324, 0.0
        %v357 = vmax.f32 %v325, 0.0
        %v358 = vpack.c.bf16 %v327, %v326
        %v359 = vpack.c.bf16 %v329, %v328
        %v360 = vpack.c.bf16 %v331, %v330
        %v361 = vpack.c.bf16 %v333, %v332
        %v362 = vpack.c.bf16 %v335, %v334
        %v363 = vpack.c.bf16 %v337, %v336
        %v364 = vpack.c.bf16 %v339, %v338
        %v365 = vpack.c.bf16 %v341, %v340
        %v366 = vpack.c.bf16 %v343, %v342
        %v367 = vpack.c.bf16 %v345, %v344
        %v368 = vpack.c.bf16 %v347, %v346
        %v369 = vpack.c.bf16 %v349, %v348
        %v370 = vpack.c.bf16 %v351, %v350
        %v371 = vpack.c.bf16 %v353, %v352
        %v372 = vpack.c.bf16 %v355, %v354
        %v373 = vpack.c.bf16 %v357, %v356
        %v390 = vunpack.c.l.b16 %v358
        %v391 = vunpack.c.h.b16 %v358
        %v392 = vunpack.c.l.b16 %v359
        %v393 = vunpack.c.h.b16 %v359
        %v394 = vunpack.c.l.b16 %v360
        %v395 = vunpack.c.h.b16 %v360
        %v396 = vunpack.c.l.b16 %v361
        %v397 = vunpack.c.h.b16 %v361
        %v398 = vunpack.c.l.b16 %v362
        %v399 = vunpack.c.h.b16 %v362
        %v400 = vunpack.c.l.b16 %v363
        %v401 = vunpack.c.h.b16 %v363
        %v402 = vunpack.c.l.b16 %v364
        %v403 = vunpack.c.h.b16 %v364
        %v404 = vunpack.c.l.b16 %v365
        %v405 = vunpack.c.h.b16 %v365
        %v406 = vunpack.c.l.b16 %v366
        %v407 = vunpack.c.h.b16 %v366
        %v408 = vunpack.c.l.b16 %v367
        %v409 = vunpack.c.h.b16 %v367
        %v410 = vunpack.c.l.b16 %v368
        %v411 = vunpack.c.h.b16 %v368
        %v412 = vunpack.c.l.b16 %v369
        %v413 = vunpack.c.h.b16 %v369
        %v414 = vunpack.c.l.b16 %v370
        %v415 = vunpack.c.h.b16 %v370
        %v416 = vunpack.c.l.b16 %v371
        %v417 = vunpack.c.h.b16 %v371
        %v418 = vunpack.c.l.b16 %v372
        %v419 = vunpack.c.h.b16 %v372
        %v420 = vunpack.c.l.b16 %v373
        %v421 = vunpack.c.h.b16 %v373
        %v422 = vpack.c.b16 %v390, %v390
        %v423 = vpack.c.b16 %v391, %v391
        %v424 = vpack.c.b16 %v392, %v392
        %v425 = vpack.c.b16 %v393, %v393
        %v426 = vpack.c.b16 %v394, %v394
        %v427 = vpack.c.b16 %v395, %v395
        %v428 = vpack.c.b16 %v396, %v396
        %v429 = vpack.c.b16 %v397, %v397
        %v430 = vpack.c.b16 %v398, %v398
        %v431 = vpack.c.b16 %v399, %v399
        %v432 = vpack.c.b16 %v400, %v400
        %v433 = vpack.c.b16 %v401, %v401
        %v434 = vpack.c.b16 %v402, %v402
        %v435 = vpack.c.b16 %v403, %v403
        %v436 = vpack.c.b16 %v404, %v404
        %v437 = vpack.c.b16 %v405, %v405
        %v438 = vpack.c.b16 %v406, %v406
        %v439 = vpack.c.b16 %v407, %v407
        %v440 = vpack.c.b16 %v408, %v408
        %v441 = vpack.c.b16 %v409, %v409
        %v442 = vpack.c.b16 %v410, %v410
        %v443 = vpack.c.b16 %v411, %v411
        %v444 = vpack.c.b16 %v412, %v412
        %v445 = vpack.c.b16 %v413, %v413
        %v446 = vpack.c.b16 %v414, %v414
        %v447 = vpack.c.b16 %v415, %v415
        %v448 = vpack.c.b16 %v416, %v416
        %v449 = vpack.c.b16 %v417, %v417
        %v450 = vpack.c.b16 %v418, %v418
        %v451 = vpack.c.b16 %v419, %v419
        %v452 = vpack.c.b16 %v420, %v420
        %v453 = vpack.c.b16 %v421, %v421
        %486 = vst [vmem:[%s213] sm:$0xf] %v422
        %487 = vst [vmem:[%s213 + $0x4] sm:$0xf] %v423
        %488 = vst [vmem:[%s213 + $0x8] sm:$0xf] %v424
        %489 = vst [vmem:[%s213 + $0xc] sm:$0xf] %v425
        %490 = vst [vmem:[%s213 + $0x10] sm:$0xf] %v426
        %491 = vst [vmem:[%s213 + $0x14] sm:$0xf] %v427
        %492 = vst [vmem:[%s213 + $0x18] sm:$0xf] %v428
        %493 = vst [vmem:[%s213 + $0x1c] sm:$0xf] %v429
        %494 = vst [vmem:[%s213 + $0x20] sm:$0xf] %v430
        %495 = vst [vmem:[%s213 + $0x24] sm:$0xf] %v431
        %496 = vst [vmem:[%s213 + $0x28] sm:$0xf] %v432
        %497 = vst [vmem:[%s213 + $0x2c] sm:$0xf] %v433
        %498 = vst [vmem:[%s213 + $0x30] sm:$0xf] %v434
        %499 = vst [vmem:[%s213 + $0x34] sm:$0xf] %v435
        %500 = vst [vmem:[%s213 + $0x38] sm:$0xf] %v436
        %501 = vst [vmem:[%s213 + $0x3c] sm:$0xf] %v437
        %502 = vst [vmem:[%s213 + $0x40] sm:$0xf] %v438
        %503 = vst [vmem:[%s213 + $0x44] sm:$0xf] %v439
        %504 = vst [vmem:[%s213 + $0x48] sm:$0xf] %v440
        %505 = vst [vmem:[%s213 + $0x4c] sm:$0xf] %v441
        %506 = vst [vmem:[%s213 + $0x50] sm:$0xf] %v442
        %507 = vst [vmem:[%s213 + $0x54] sm:$0xf] %v443
        %508 = vst [vmem:[%s213 + $0x58] sm:$0xf] %v444
        %509 = vst [vmem:[%s213 + $0x5c] sm:$0xf] %v445
        %510 = vst [vmem:[%s213 + $0x60] sm:$0xf] %v446
        %511 = vst [vmem:[%s213 + $0x64] sm:$0xf] %v447
        %512 = vst [vmem:[%s213 + $0x68] sm:$0xf] %v448
        %513 = vst [vmem:[%s213 + $0x6c] sm:$0xf] %v449
        %514 = vst [vmem:[%s213 + $0x70] sm:$0xf] %v450
        %515 = vst [vmem:[%s213 + $0x74] sm:$0xf] %v451
        %516 = vst [vmem:[%s213 + $0x78] sm:$0xf] %v452
        %517 = vst [vmem:[%s213 + $0x7c] sm:$0xf] %v453
        %s518 = sand.u32 %s97, 1
        %s519 = scalar_lea.sflag [#allocation4], %s518
        %s520 = sand.u32 %s97, 1
        %s521 = smul.addr %s520, 128
        %s522 = scalar_lea.vmem [#allocation8], %s521
        // Predicated region
        $region45: #{basic_block_forward.5} parent=31 // pred_check
          %p523 = pneg %p107
        $region46: #{basic_block_forward.5} parent=31 // pred_check_branch
          %525 = sbr.rel (%p523) target = $region48
        $region47: #{basic_block_forward.5} parent=31 // pred_region
          %s526 = smul.u32 32, %s21
          %s528 = ssub.s32 2048, 2048
          %529 = vsyncadd %s519, %s528
          %s530 = smul.addr %s526, 64
          %s531 = scalar_lea.hbm %s3, %s530
          %s532 = sshll.u32 %s522, 4
          %s533 = int_to_ptr.vmem [resolvable:$true] %s532
          %538 = dma.vmem_to_hbm [thread:$0]  %s533, 2048, %s531, %s519, 64, 64, 4
        $region48: #{basic_block_forward.5} parent=31 // pred_fallthru
          _
      $region32: #{basic_block_forward.5} parent=5 // pred_fallthru
        _
      %p539 = scmp.le.s32.totalorder 2, %s16
      // Predicated region
      $region49: #{basic_block_forward.5} parent=5 // pred_check
        %p540 = pneg %p539
      $region50: #{basic_block_forward.5} parent=5 // pred_check_branch
        %542 = sbr.rel (%p540) target = $region52
      $region51: #{basic_block_forward.5} parent=5 // pred_region
        %s543 = ssub.s32 %s16, 2
        // Predicated region
        $region53: #{basic_block_forward.5} parent=51 // pred_check
          %p544 = pneg %p113
        $region54: #{basic_block_forward.5} parent=51 // pred_check_branch
          %546 = sbr.rel (%p544) target = $region56
        $region55: #{basic_block_forward.5} parent=51 // pred_region
          %s547 = sand.u32 %s98, 1
          %s548 = scalar_lea.sflag [#allocation4], %s547
          %s549 = sand.u32 %s98, 1
          %s550 = smul.addr %s549, 128
          %s551 = scalar_lea.vmem [#allocation8], %s550
          %552 = dma.done %s548, 2048
        $region56: #{basic_block_forward.5} parent=51 // pred_fallthru
          _
      $region52: #{basic_block_forward.5} parent=5 // pred_fallthru
        _
    $region6: #{basic_block_forward.5} parent=1 // loop_footer
      %s20 = sadd.s32 1, %s16
    $region7: #{basic_block_forward.5} parent=1 // loop_footer_branch
      %15 = sbr.rel target = $region3
    $region8: #{basic_block_forward.5} parent=1 // loop_exit
      _
    %553 = vsyncpa [#allocation3], 1
    %s554 = scalar_lea.sflag [#allocation3], 1
    %555 = vsyncpa %s554, 1
    %556 = vsyncpa [#allocation6], 1
    %557 = vsyncpa [#allocation4], 1
    %s558 = scalar_lea.sflag [#allocation4], 1
    %559 = vsyncpa %s558, 1

// kernel: basic_block_forward.4
$region0: #{basic_block_forward.4}
  #allocation0 [shape = 'u32[]', space=smem, size = 0x4, offset = 0x4, fixed_abs, tag = 'smem constant byte address 0x4 - core index']
  #allocation1 [shape = 'u32[144,128]{1,0:T(1,128)}', space=vmem, size = 0x12000, scoped, tag = 'internal scratch']
  %s0 = inlined_call_operand.hbm [shape: bf16[512,36], index: 0, kind: input, shape index: {}]
  %s1 = inlined_call_operand.hbm [shape: bf16[36,128], index: 1, kind: input, shape index: {}]
  %s2 = inlined_call_operand.hbm [shape: f32[512,128], index: 2, kind: output, shape index: {0}]
  %s3 = inlined_call_operand.hbm [shape: f32[2,8,128], index: 3, kind: output, shape index: {1}]
  %4 = xla_tuple %s2, %s3
  %s5 = sld [smem:[#allocation0]]
  $region57: #{basic_block_forward.4} parent=0
    _
  %s7 = ssub.s32 1, %s5
  %s8 = scalar_select 0, %s7, %s5
  $region1: #{basic_block_forward.4} parent=0
    #allocation2 [shape = 'u8[131072]{0}', space=vmem, size = 0x20000, scoped, tag = 'input window, operand 0']
    #allocation3 [shape = 's32[2]{0}', space=sflag, size = 0x8, scoped, tag = 'scoped memory for basic_block_forward.4']
    #allocation4 [shape = 's32[2]{0}', space=sflag, size = 0x8, scoped, tag = 'scoped memory for basic_block_forward.4']
    #allocation5 [shape = 'u8[10240]{0}', space=vmem, size = 0x2800, scoped, tag = 'input window, operand 1, single buffered']
    #allocation6 [shape = 's32[1]{0}', space=sflag, size = 0x4, scoped, tag = 'scoped memory for basic_block_forward.4']
    #allocation7 [shape = 'u8[262144]{0}', space=vmem, size = 0x40000, scoped, tag = 'output window, operand 0']
    #allocation8 [shape = 'u8[8192]{0}', space=vmem, size = 0x2000, scoped, tag = 'output window, operand 1']
    #allocation9 [shape = 's32[2]{0}', space=sflag, size = 0x8, scoped, tag = 'scoped memory for basic_block_forward.4']
    %9 = vsyncpa [#allocation3], 0
    %s10 = scalar_lea.sflag [#allocation3], 1
    %11 = vsyncpa %s10, 0
    %12 = vsyncpa [#allocation6], 0
    %13 = vsyncpa [#allocation4], 0
    %s14 = scalar_lea.sflag [#allocation4], 1
    %15 = vsyncpa %s14, 0
    %16 = vsyncpa [#allocation9], 0
    %s17 = scalar_lea.sflag [#allocation9], 1
    %18 = vsyncpa %s17, 0
    loop: start=0, step=1, limit=4
    $region2: #{basic_block_forward.4} parent=1 // loop_pre_header
      _
    $region3: #{basic_block_forward.4} parent=1 // loop_header
      %s20 = sphi 0, %s24
      %p21 = scmp.ge.s32.totalorder %s20, 4
      %s30 = sphi 0, %s32
      %s33 = sphi 0, %s30
      %s34 = sphi 0, %s33
      %s50 = sphi 0, %s34
      %s54 = sphi 0, %s54
      %s56 = sphi 0, %s54
      %s57 = sphi 0, %s56
      %s71 = sphi 0, %s57
      %s77 = sphi 0, %s79
      %s80 = sphi 0, %s77
      %s81 = sphi 0, %s80
      %s97 = sphi 0, %s81
      %s103 = sphi 0, %s105
      %s106 = sphi 0, %s103
      %s107 = sphi 0, %s106
      %s123 = sphi 0, %s107
    $region4: #{basic_block_forward.4} parent=1 // loop_header_branch
      %23 = sbr.rel (%p21) target = $region8
    $region5: #{basic_block_forward.4} parent=1 // loop_body
      %s25 = ssub.s32 %s20, 1
      %s26 = ssub.s32 %s20, 2
      %s27 = sadd.s32 %s20, 1
      %s28 = ssub.s32 %s20, %s27
      %p29 = scmp.eq.s32.totalorder %s28, 0
      %s31 = sadd.s32 %s30, 1
      %s32 = scalar_select %p29, %s30, %s31
      %p35 = pneg %p29
      %p36 = scmp.eq.s32.totalorder %s20, 1
      %p37 = por %p35, %p36
      %p38 = scmp.ne.s32.totalorder %s30, %s33
      %p39 = scmp.eq.s32.totalorder %s20, 0
      %p40 = por %p38, %p39
      %p41 = scmp.ne.s32.totalorder %s30, %s33
      %p42 = scmp.eq.s32.totalorder %s25, 1
      %p43 = por %p41, %p42
      %p44 = scmp.ne.s32.totalorder %s33, %s34
      %p45 = scmp.eq.s32.totalorder %s25, 0
      %p46 = por %p44, %p45
      %p47 = scmp.ne.s32.totalorder %s33, %s34
      %p48 = scmp.eq.s32.totalorder %s26, 1
      %p49 = por %p47, %p48
      %p51 = scmp.ne.s32.totalorder %s34, %s50
      %p52 = scmp.eq.s32.totalorder %s26, 0
      %p53 = por %p51, %p52
      %s55 = sadd.s32 %s54, 1
      %p58 = scmp.eq.s32.totalorder %s20, 1
      %p59 = scmp.ne.s32.totalorder %s54, %s56
      %p60 = scmp.eq.s32.totalorder %s20, 0
      %p61 = por %p59, %p60
      %p62 = scmp.ne.s32.totalorder %s54, %s56
      %p63 = scmp.eq.s32.totalorder %s25, 1
      %p64 = por %p62, %p63
      %p65 = scmp.ne.s32.totalorder %s56, %s57
      %p66 = scmp.eq.s32.totalorder %s25, 0
      %p67 = por %p65, %p66
      %p68 = scmp.ne.s32.totalorder %s56, %s57
      %p69 = scmp.eq.s32.totalorder %s26, 1
      %p70 = por %p68, %p69
      %p72 = scmp.ne.s32.totalorder %s57, %s71
      %p73 = scmp.eq.s32.totalorder %s26, 0
      %p74 = por %p72, %p73
      %s75 = ssub.s32 %s20, %s27
      %p76 = scmp.eq.s32.totalorder %s75, 0
      %s78 = sadd.s32 %s77, 1
      %s79 = scalar_select %p76, %s77, %s78
      %p82 = pneg %p76
      %p83 = scmp.eq.s32.totalorder %s20, 1
      %p84 = por %p82, %p83
      %p85 = scmp.ne.s32.totalorder %s77, %s80
      %p86 = scmp.eq.s32.totalorder %s20, 0
      %p87 = por %p85, %p86
      %p88 = scmp.ne.s32.totalorder %s77, %s80
      %p89 = scmp.eq.s32.totalorder %s25, 1
      %p90 = por %p88, %p89
      %p91 = scmp.ne.s32.totalorder %s80, %s81
      %p92 = scmp.eq.s32.totalorder %s25, 0
      %p93 = por %p91, %p92
      %p94 = scmp.ne.s32.totalorder %s80, %s81
      %p95 = scmp.eq.s32.totalorder %s26, 1
      %p96 = por %p94, %p95
      %p98 = scmp.ne.s32.totalorder %s81, %s97
      %p99 = scmp.eq.s32.totalorder %s26, 0
      %p100 = por %p98, %p99
      %s101 = ssub.s32 %s20, %s27
      %p102 = scmp.eq.s32.totalorder %s101, 0
      %s104 = sadd.s32 %s103, 1
      %s105 = scalar_select %p102, %s103, %s104
      %p108 = pneg %p102
      %p109 = scmp.eq.s32.totalorder %s20, 1
      %p110 = por %p108, %p109
      %p111 = scmp.ne.s32.totalorder %s103, %s106
      %p112 = scmp.eq.s32.totalorder %s20, 0
      %p113 = por %p111, %p112
      %p114 = scmp.ne.s32.totalorder %s103, %s106
      %p115 = scmp.eq.s32.totalorder %s25, 1
      %p116 = por %p114, %p115
      %p117 = scmp.ne.s32.totalorder %s106, %s107
      %p118 = scmp.eq.s32.totalorder %s25, 0
      %p119 = por %p117, %p118
      %p120 = scmp.ne.s32.totalorder %s106, %s107
      %p121 = scmp.eq.s32.totalorder %s26, 1
      %p122 = por %p120, %p121
      %p124 = scmp.ne.s32.totalorder %s107, %s123
      %p125 = scmp.eq.s32.totalorder %s26, 0
      %p126 = por %p124, %p125
      %p127 = scmp.le.s32.totalorder 1, %s20
      %p128 = scmp.lt.s32.totalorder %s20, 3
      %p129 = pnand %p127, %p128
      %p130 = pneg %p129
      // Predicated region
      $region9: #{basic_block_forward.4} parent=5 // pred_check
        _
      $region10: #{basic_block_forward.4} parent=5 // pred_check_branch
        %132 = sbr.rel (%p129) target = $region12
      $region11: #{basic_block_forward.4} parent=5 // pred_region
        %s133 = ssub.s32 %s20, 1
        // Predicated region
        $region13: #{basic_block_forward.4} parent=11 // pred_check
          %p134 = pneg %p67
        $region14: #{basic_block_forward.4} parent=11 // pred_check_branch
          %136 = sbr.rel (%p134) target = $region16
        $region15: #{basic_block_forward.4} parent=11 // pred_region
          %s138 = ssub.s32 320, 320
          %139 = vsyncadd [#allocation6], %s138
          %s140 = sshll.u32 [#allocation5], 4
          %s141 = int_to_ptr.vmem [resolvable:$true] %s140
          %146 = dma.hbm_to_vmem [thread:$0]  %s1, 320, %s141, [#allocation6], 64, 64, 4
        $region16: #{basic_block_forward.4} parent=11 // pred_fallthru
          _
      $region12: #{basic_block_forward.4} parent=5 // pred_fallthru
        _
      %p147 = scmp.lt.s32.totalorder %s20, 2
      // Predicated region
      $region17: #{basic_block_forward.4} parent=5 // pred_check
        %p148 = pneg %p147
      $region18: #{basic_block_forward.4} parent=5 // pred_check_branch
        %150 = sbr.rel (%p148) target = $region20
      $region19: #{basic_block_forward.4} parent=5 // pred_region
        // Predicated region
        $region21: #{basic_block_forward.4} parent=19 // pred_check
          %p151 = pneg %p40
        $region22: #{basic_block_forward.4} parent=19 // pred_check_branch
          %153 = sbr.rel (%p151) target = $region24
        $region23: #{basic_block_forward.4} parent=19 // pred_region
          %s154 = sand.u32 %s30, 1
          %s155 = scalar_lea.sflag [#allocation3], %s154
          %s156 = sand.u32 %s30, 1
          %s157 = smul.addr %s156, 128
          %s158 = scalar_lea.vmem [#allocation2], %s157
          %s159 = smul.u32 32, %s20
          %s161 = ssub.s32 2048, 2048
          %162 = vsyncadd %s155, %s161
          %s163 = smul.addr %s159, 64
          %s164 = scalar_lea.hbm %s0, %s163
          %s165 = sshll.u32 %s158, 4
          %s166 = int_to_ptr.vmem [resolvable:$true] %s165
          %171 = dma.hbm_to_vmem [thread:$0]  %s164, 2048, %s166, %s155, 64, 64, 4
        $region24: #{basic_block_forward.4} parent=19 // pred_fallthru
          _
      $region20: #{basic_block_forward.4} parent=5 // pred_fallthru
        _
      %p172 = scmp.le.s32.totalorder 1, %s20
      %p173 = scmp.lt.s32.totalorder %s20, 3
      %p174 = pnand %p172, %p173
      %p175 = pneg %p174
      // Predicated region
      $region25: #{basic_block_forward.4} parent=5 // pred_check
        _
      $region26: #{basic_block_forward.4} parent=5 // pred_check_branch
        %177 = sbr.rel (%p174) target = $region28
      $region27: #{basic_block_forward.4} parent=5 // pred_region
        %s178 = ssub.s32 %s20, 1
        %s179 = sand.u32 %s33, 1
        %s180 = scalar_lea.sflag [#allocation3], %s179
        %s181 = sand.u32 %s33, 1
        %s182 = smul.addr %s181, 128
        %s183 = scalar_lea.vmem [#allocation2], %s182
        // Predicated region
        $region29: #{basic_block_forward.4} parent=27 // pred_check
          %p184 = pneg %p46
        $region30: #{basic_block_forward.4} parent=27 // pred_check_branch
          %186 = sbr.rel (%p184) target = $region32
        $region31: #{basic_block_forward.4} parent=27 // pred_region
          %187 = dma.done %s180, 2048
        $region32: #{basic_block_forward.4} parent=27 // pred_fallthru
          _
        // Predicated region
        $region33: #{basic_block_forward.4} parent=27 // pred_check
          %p188 = pneg %p67
        $region34: #{basic_block_forward.4} parent=27 // pred_check_branch
          %190 = sbr.rel (%p188) target = $region36
        $region35: #{basic_block_forward.4} parent=27 // pred_region
          %191 = dma.done [#allocation6], 320
        $region36: #{basic_block_forward.4} parent=27 // pred_fallthru
          _
        %s192 = sand.u32 %s33, 1
        %s193 = scalar_lea.sflag [#allocation3], %s192
        %s194 = sand.u32 %s33, 1
        %s195 = smul.addr %s194, 128
        %s196 = scalar_lea.vmem [#allocation2], %s195
        %p197 = pneg %p46
        %p198 = pneg %p43
        %p199 = pneg %p67
        %p200 = pneg %p64
        %p201 = pneg %p93
        %p202 = pneg %p90
        %s203 = sand.u32 %s80, 1
        %s204 = scalar_lea.sflag [#allocation4], %s203
        %s205 = sand.u32 %s80, 1
        %s206 = smul.addr %s205, 256
        %s207 = scalar_lea.vmem [#allocation7], %s206
        %p208 = pneg %p119
        %p209 = pneg %p116
        %s210 = sand.u32 %s106, 1
        %s211 = scalar_lea.sflag [#allocation9], %s210
        %s212 = sand.u32 %s106, 1
        %s213 = smul.addr %s212, 8
        %s214 = scalar_lea.vmem [#allocation8], %s213
        %s215 = smul.u32 32, %s25
        %s216 = smul.u32 32, %s25
        %v218 = vld [vmem:[%s183] sm:$0xf]
        %v219 = vld [vmem:[%s183 + $0x4] sm:$0xf]
        %v220 = vld [vmem:[%s183 + $0x8] sm:$0xf]
        %v221 = vld [vmem:[%s183 + $0xc] sm:$0xf]
        %v222 = vld [vmem:[%s183 + $0x10] sm:$0xf]
        %v223 = vld [vmem:[%s183 + $0x14] sm:$0xf]
        %v224 = vld [vmem:[%s183 + $0x18] sm:$0xf]
        %v225 = vld [vmem:[%s183 + $0x1c] sm:$0xf]
        %v226 = vld [vmem:[%s183 + $0x20] sm:$0xf]
        %v227 = vld [vmem:[%s183 + $0x24] sm:$0xf]
        %v228 = vld [vmem:[%s183 + $0x28] sm:$0xf]
        %v229 = vld [vmem:[%s183 + $0x2c] sm:$0xf]
        %v230 = vld [vmem:[%s183 + $0x30] sm:$0xf]
        %v231 = vld [vmem:[%s183 + $0x34] sm:$0xf]
        %v232 = vld [vmem:[%s183 + $0x38] sm:$0xf]
        %v233 = vld [vmem:[%s183 + $0x3c] sm:$0xf]
        %v234 = vld [vmem:[%s183 + $0x40] sm:$0xf]
        %v235 = vld [vmem:[%s183 + $0x44] sm:$0xf]
        %v236 = vld [vmem:[%s183 + $0x48] sm:$0xf]
        %v237 = vld [vmem:[%s183 + $0x4c] sm:$0xf]
        %v238 = vld [vmem:[%s183 + $0x50] sm:$0xf]
        %v239 = vld [vmem:[%s183 + $0x54] sm:$0xf]
        %v240 = vld [vmem:[%s183 + $0x58] sm:$0xf]
        %v241 = vld [vmem:[%s183 + $0x5c] sm:$0xf]
        %v242 = vld [vmem:[%s183 + $0x60] sm:$0xf]
        %v243 = vld [vmem:[%s183 + $0x64] sm:$0xf]
        %v244 = vld [vmem:[%s183 + $0x68] sm:$0xf]
        %v245 = vld [vmem:[%s183 + $0x6c] sm:$0xf]
        %v246 = vld [vmem:[%s183 + $0x70] sm:$0xf]
        %v247 = vld [vmem:[%s183 + $0x74] sm:$0xf]
        %v248 = vld [vmem:[%s183 + $0x78] sm:$0xf]
        %v249 = vld [vmem:[%s183 + $0x7c] sm:$0xf]
        %v250 = vld [vmem:[#allocation5] sm:$0xf]
        %v251 = vld [vmem:[#allocation5 + $0x4] sm:$0xf]
        %v252 = vld [vmem:[#allocation5 + $0x8] sm:$0xf]
        %v253 = vld [vmem:[#allocation5 + $0xc] sm:$0xf]
        %v254 = vld [vmem:[#allocation5 + $0x10] sm:$0x3]
        %v287 = vunpack.c.l.b16 %v218
        %v288 = vunpack.c.l.b16 %v219
        %v289 = vunpack.c.l.b16 %v220
        %v290 = vunpack.c.l.b16 %v221
        %v291 = vunpack.c.l.b16 %v222
        %v292 = vunpack.c.l.b16 %v223
        %v293 = vunpack.c.l.b16 %v224
        %v294 = vunpack.c.l.b16 %v225
        %v295 = vunpack.c.l.b16 %v226
        %v296 = vunpack.c.l.b16 %v227
        %v297 = vunpack.c.l.b16 %v228
        %v298 = vunpack.c.l.b16 %v229
        %v299 = vunpack.c.l.b16 %v230
        %v300 = vunpack.c.l.b16 %v231
        %v301 = vunpack.c.l.b16 %v232
        %v302 = vunpack.c.l.b16 %v233
        %v303 = vunpack.c.l.b16 %v234
        %v304 = vunpack.c.l.b16 %v235
        %v305 = vunpack.c.l.b16 %v236
        %v306 = vunpack.c.l.b16 %v237
        %v307 = vunpack.c.l.b16 %v238
        %v308 = vunpack.c.l.b16 %v239
        %v309 = vunpack.c.l.b16 %v240
        %v310 = vunpack.c.l.b16 %v241
        %v311 = vunpack.c.l.b16 %v242
        %v312 = vunpack.c.l.b16 %v243
        %v313 = vunpack.c.l.b16 %v244
        %v314 = vunpack.c.l.b16 %v245
        %v315 = vunpack.c.l.b16 %v246
        %v316 = vunpack.c.l.b16 %v247
        %v317 = vunpack.c.l.b16 %v248
        %v318 = vunpack.c.l.b16 %v249
        %v319 = vpack.c.b16 %v288, %v287
        %v320 = vpack.c.b16 %v290, %v289
        %v321 = vpack.c.b16 %v292, %v291
        %v322 = vpack.c.b16 %v294, %v293
        %v323 = vpack.c.b16 %v296, %v295
        %v324 = vpack.c.b16 %v298, %v297
        %v325 = vpack.c.b16 %v300, %v299
        %v326 = vpack.c.b16 %v302, %v301
        %v327 = vpack.c.b16 %v304, %v303
        %v328 = vpack.c.b16 %v306, %v305
        %v329 = vpack.c.b16 %v308, %v307
        %v330 = vpack.c.b16 %v310, %v309
        %v331 = vpack.c.b16 %v312, %v311
        %v332 = vpack.c.b16 %v314, %v313
        %v333 = vpack.c.b16 %v316, %v315
        %v334 = vpack.c.b16 %v318, %v317
        %v340 = vunpack.c.l.b16 %v250
        %v341 = vunpack.c.l.b16 %v251
        %v342 = vunpack.c.l.b16 %v252
        %v343 = vunpack.c.l.b16 %v253
        %v344 = vunpack.c.l.b16 %v254
        %v345 = vpack.c.b16 %v341, %v340
        %v346 = vpack.c.b16 %v343, %v342
        %v347 = vpack.c.b16 %v344, %v344
        %vm350 = vcmask 293888
        %v352 = vsel %vm350, %v319, 0
        %v355 = vsel %vm350, %v320, 0
        %v358 = vsel %vm350, %v321, 0
        %v361 = vsel %vm350, %v322, 0
        %v364 = vsel %vm350, %v323, 0
        %v367 = vsel %vm350, %v324, 0
        %v370 = vsel %vm350, %v325, 0
        %v373 = vsel %vm350, %v326, 0
        %v376 = vsel %vm350, %v327, 0
        %v379 = vsel %vm350, %v328, 0
        %v382 = vsel %vm350, %v329, 0
        %v385 = vsel %vm350, %v330, 0
        %v388 = vsel %vm350, %v331, 0
        %v391 = vsel %vm350, %v332, 0
        %v394 = vsel %vm350, %v333, 0
        %v397 = vsel %vm350, %v334, 0
        %vm399 = vcmask 1041408
        %v401 = vsel %vm399, %v347, 0
        %403 = vmatprep.subr.bf16.mxu0 0
        %404 = vmatpush1.bf16.msra.mxu0 %v345
        %405 = vmatprep.subr.bf16.mxu0 0
        %406 = vmatpush1.bf16.msra.mxu0 %v346
        %407 = vmatprep.subr.bf16.mxu0 0
        %408 = vmatpush1.bf16.msra.mxu0 %v401
        %409 = vmatprep.subr.bf16.mxu0 0
        %410 = vmatpush1.bf16.msra.mxu0 0
        %411 = vmatprep.subr.bf16.mxu0 0
        %412 = vmatpush1.bf16.msra.mxu0 0
        %413 = vmatprep.subr.bf16.mxu0 0
        %414 = vmatpush1.bf16.msra.mxu0 0
        %415 = vmatprep.subr.bf16.mxu0 0
        %416 = vmatpush1.bf16.msra.mxu0 0
        %417 = vmatprep.subr.bf16.mxu0 0
        %418 = vmatpush1.bf16.msra.mxu0 0
        %419 = vmatprep.subr.bf16.mxu0 0
        %420 = vmatpush1.bf16.msra.mxu0 0
        %421 = vmatprep.subr.bf16.mxu0 0
        %422 = vmatpush1.bf16.msra.mxu0 0
        %423 = vmatprep.subr.bf16.mxu0 0
        %424 = vmatpush1.bf16.msra.mxu0 0
        %425 = vmatprep.subr.bf16.mxu0 0
        %426 = vmatpush1.bf16.msra.mxu0 0
        %427 = vmatprep.subr.bf16.mxu0 0
        %428 = vmatpush1.bf16.msra.mxu0 0
        %429 = vmatprep.subr.bf16.mxu0 0
        %430 = vmatpush1.bf16.msra.mxu0 0
        %431 = vmatprep.subr.bf16.mxu0 0
        %432 = vmatpush1.bf16.msra.mxu0 0
        %433 = vmatprep.subr.bf16.mxu0 0
        %434 = vmatpush1.bf16.msra.mxu0 0
        %435 = vmatprep.mubr.bf16.mxu0 0
        %436 = vmatmul.mubr.bf16.gmra.mrb[0].mxu0 %v352
        %v437 = vpop.f32.mrb[0].mxu0
        %v438 = vadd.f32 0.0, %v437
        %v439 = vpop.f32.mrb[0].mxu0
        %v440 = vpop.f32.mrb[0].mxu0
        %v441 = vadd.f32 0.0, %v440
        %v442 = vpop.f32.mrb[0].mxu0
        %443 = vmatprep.mubr.bf16.mxu0 0
        %444 = vmatmul.mubr.bf16.gmra.mrb[0].mxu0 %v355
        %v445 = vpop.f32.mrb[0].mxu0
        %v446 = vadd.f32 0.0, %v445
        %v447 = vpop.f32.mrb[0].mxu0
        %v448 = vpop.f32.mrb[0].mxu0
        %v449 = vadd.f32 0.0, %v448
        %v450 = vpop.f32.mrb[0].mxu0
        %451 = vmatprep.mubr.bf16.mxu0 0
        %452 = vmatmul.mubr.bf16.gmra.mrb[0].mxu0 %v358
        %v453 = vpop.f32.mrb[0].mxu0
        %v454 = vadd.f32 0.0, %v453
        %v455 = vpop.f32.mrb[0].mxu0
        %v456 = vpop.f32.mrb[0].mxu0
        %v457 = vadd.f32 0.0, %v456
        %v458 = vpop.f32.mrb[0].mxu0
        %459 = vmatprep.mubr.bf16.mxu0 0
        %460 = vmatmul.mubr.bf16.gmra.mrb[0].mxu0 %v361
        %v461 = vpop.f32.mrb[0].mxu0
        %v462 = vadd.f32 0.0, %v461
        %v463 = vpop.f32.mrb[0].mxu0
        %v464 = vpop.f32.mrb[0].mxu0
        %v465 = vadd.f32 0.0, %v464
        %v466 = vpop.f32.mrb[0].mxu0
        %467 = vmatprep.mubr.bf16.mxu0 0
        %468 = vmatmul.mubr.bf16.gmra.mrb[0].mxu0 %v364
        %v469 = vpop.f32.mrb[0].mxu0
        %v470 = vadd.f32 0.0, %v469
        %v471 = vpop.f32.mrb[0].mxu0
        %v472 = vpop.f32.mrb[0].mxu0
        %v473 = vadd.f32 0.0, %v472
        %v474 = vpop.f32.mrb[0].mxu0
        %475 = vmatprep.mubr.bf16.mxu0 0
        %476 = vmatmul.mubr.bf16.gmra.mrb[0].mxu0 %v367
        %v477 = vpop.f32.mrb[0].mxu0
        %v478 = vadd.f32 0.0, %v477
        %v479 = vpop.f32.mrb[0].mxu0
        %v480 = vpop.f32.mrb[0].mxu0
        %v481 = vadd.f32 0.0, %v480
        %v482 = vpop.f32.mrb[0].mxu0
        %483 = vmatprep.mubr.bf16.mxu0 0
        %484 = vmatmul.mubr.bf16.gmra.mrb[0].mxu0 %v370
        %v485 = vpop.f32.mrb[0].mxu0
        %v486 = vadd.f32 0.0, %v485
        %v487 = vpop.f32.mrb[0].mxu0
        %v488 = vpop.f32.mrb[0].mxu0
        %v489 = vadd.f32 0.0, %v488
        %v490 = vpop.f32.mrb[0].mxu0
        %491 = vmatprep.mubr.bf16.mxu0 0
        %492 = vmatmul.mubr.bf16.gmra.mrb[0].mxu0 %v373
        %v493 = vpop.f32.mrb[0].mxu0
        %v494 = vadd.f32 0.0, %v493
        %v495 = vpop.f32.mrb[0].mxu0
        %v496 = vpop.f32.mrb[0].mxu0
        %v497 = vadd.f32 0.0, %v496
        %v498 = vpop.f32.mrb[0].mxu0
        %499 = vmatprep.mubr.bf16.mxu0 0
        %500 = vmatmul.mubr.bf16.gmra.mrb[0].mxu0 %v376
        %v501 = vpop.f32.mrb[0].mxu0
        %v502 = vadd.f32 0.0, %v501
        %v503 = vpop.f32.mrb[0].mxu0
        %v504 = vpop.f32.mrb[0].mxu0
        %v505 = vadd.f32 0.0, %v504
        %v506 = vpop.f32.mrb[0].mxu0
        %507 = vmatprep.mubr.bf16.mxu0 0
        %508 = vmatmul.mubr.bf16.gmra.mrb[0].mxu0 %v379
        %v509 = vpop.f32.mrb[0].mxu0
        %v510 = vadd.f32 0.0, %v509
        %v511 = vpop.f32.mrb[0].mxu0
        %v512 = vpop.f32.mrb[0].mxu0
        %v513 = vadd.f32 0.0, %v512
        %v514 = vpop.f32.mrb[0].mxu0
        %515 = vmatprep.mubr.bf16.mxu0 0
        %516 = vmatmul.mubr.bf16.gmra.mrb[0].mxu0 %v382
        %v517 = vpop.f32.mrb[0].mxu0
        %v518 = vadd.f32 0.0, %v517
        %v519 = vpop.f32.mrb[0].mxu0
        %v520 = vpop.f32.mrb[0].mxu0
        %v521 = vadd.f32 0.0, %v520
        %v522 = vpop.f32.mrb[0].mxu0
        %523 = vmatprep.mubr.bf16.mxu0 0
        %524 = vmatmul.mubr.bf16.gmra.mrb[0].mxu0 %v385
        %v525 = vpop.f32.mrb[0].mxu0
        %v526 = vadd.f32 0.0, %v525
        %v527 = vpop.f32.mrb[0].mxu0
        %v528 = vpop.f32.mrb[0].mxu0
        %v529 = vadd.f32 0.0, %v528
        %v530 = vpop.f32.mrb[0].mxu0
        %531 = vmatprep.mubr.bf16.mxu0 0
        %532 = vmatmul.mubr.bf16.gmra.mrb[0].mxu0 %v388
        %v533 = vpop.f32.mrb[0].mxu0
        %v534 = vadd.f32 0.0, %v533
        %v535 = vpop.f32.mrb[0].mxu0
        %v536 = vpop.f32.mrb[0].mxu0
        %v537 = vadd.f32 0.0, %v536
        %v538 = vpop.f32.mrb[0].mxu0
        %539 = vmatprep.mubr.bf16.mxu0 0
        %540 = vmatmul.mubr.bf16.gmra.mrb[0].mxu0 %v391
        %v541 = vpop.f32.mrb[0].mxu0
        %v542 = vadd.f32 0.0, %v541
        %v543 = vpop.f32.mrb[0].mxu0
        %v544 = vpop.f32.mrb[0].mxu0
        %v545 = vadd.f32 0.0, %v544
        %v546 = vpop.f32.mrb[0].mxu0
        %547 = vmatprep.mubr.bf16.mxu0 0
        %548 = vmatmul.mubr.bf16.gmra.mrb[0].mxu0 %v394
        %v549 = vpop.f32.mrb[0].mxu0
        %v550 = vadd.f32 0.0, %v549
        %v551 = vpop.f32.mrb[0].mxu0
        %v552 = vpop.f32.mrb[0].mxu0
        %v553 = vadd.f32 0.0, %v552
        %v554 = vpop.f32.mrb[0].mxu0
        %555 = vmatprep.mubr.bf16.mxu0 0
        %556 = vmatmul.mubr.bf16.gmra.mrb[0].mxu0 %v397
        %v557 = vpop.f32.mrb[0].mxu0
        %v558 = vadd.f32 0.0, %v557
        %v559 = vpop.f32.mrb[0].mxu0
        %v560 = vpop.f32.mrb[0].mxu0
        %v561 = vadd.f32 0.0, %v560
        %v562 = vpop.f32.mrb[0].mxu0
        %563 = vdwg.mxu0
        %564 = vst [vmem:[%s207] sm:$0xff] %v438
        %565 = vst [vmem:[%s207 + $0x8] sm:$0xff] %v441
        %566 = vst [vmem:[%s207 + $0x10] sm:$0xff] %v446
        %567 = vst [vmem:[%s207 + $0x18] sm:$0xff] %v449
        %568 = vst [vmem:[%s207 + $0x20] sm:$0xff] %v454
        %569 = vst [vmem:[%s207 + $0x28] sm:$0xff] %v457
        %570 = vst [vmem:[%s207 + $0x30] sm:$0xff] %v462
        %571 = vst [vmem:[%s207 + $0x38] sm:$0xff] %v465
        %572 = vst [vmem:[%s207 + $0x40] sm:$0xff] %v470
        %573 = vst [vmem:[%s207 + $0x48] sm:$0xff] %v473
        %574 = vst [vmem:[%s207 + $0x50] sm:$0xff] %v478
        %575 = vst [vmem:[%s207 + $0x58] sm:$0xff] %v481
        %576 = vst [vmem:[%s207 + $0x60] sm:$0xff] %v486
        %577 = vst [vmem:[%s207 + $0x68] sm:$0xff] %v489
        %578 = vst [vmem:[%s207 + $0x70] sm:$0xff] %v494
        %579 = vst [vmem:[%s207 + $0x78] sm:$0xff] %v497
        %580 = vst [vmem:[%s207 + $0x80] sm:$0xff] %v502
        %581 = vst [vmem:[%s207 + $0x88] sm:$0xff] %v505
        %582 = vst [vmem:[%s207 + $0x90] sm:$0xff] %v510
        %583 = vst [vmem:[%s207 + $0x98] sm:$0xff] %v513
        %584 = vst [vmem:[%s207 + $0xa0] sm:$0xff] %v518
        %585 = vst [vmem:[%s207 + $0xa8] sm:$0xff] %v521
        %586 = vst [vmem:[%s207 + $0xb0] sm:$0xff] %v526
        %587 = vst [vmem:[%s207 + $0xb8] sm:$0xff] %v529
        %588 = vst [vmem:[%s207 + $0xc0] sm:$0xff] %v534
        %589 = vst [vmem:[%s207 + $0xc8] sm:$0xff] %v537
        %590 = vst [vmem:[%s207 + $0xd0] sm:$0xff] %v542
        %591 = vst [vmem:[%s207 + $0xd8] sm:$0xff] %v545
        %592 = vst [vmem:[%s207 + $0xe0] sm:$0xff] %v550
        %593 = vst [vmem:[%s207 + $0xe8] sm:$0xff] %v553
        %594 = vst [vmem:[%s207 + $0xf0] sm:$0xff] %v558
        %595 = vst [vmem:[%s207 + $0xf8] sm:$0xff] %v561
        %v596 = vadd.f32 %v438, %v441
        %v597 = vadd.f32 %v596, %v446
        %v598 = vadd.f32 %v597, %v449
        %v599 = vadd.f32 %v598, %v454
        %v600 = vadd.f32 %v599, %v457
        %v601 = vadd.f32 %v600, %v462
        %v602 = vadd.f32 %v601, %v465
        %v603 = vadd.f32 %v602, %v470
        %v604 = vadd.f32 %v603, %v473
        %v605 = vadd.f32 %v604, %v478
        %v606 = vadd.f32 %v605, %v481
        %v607 = vadd.f32 %v606, %v486
        %v608 = vadd.f32 %v607, %v489
        %v609 = vadd.f32 %v608, %v494
        %v610 = vadd.f32 %v609, %v497
        %v611 = vadd.f32 %v610, %v502
        %v612 = vadd.f32 %v611, %v505
        %v613 = vadd.f32 %v612, %v510
        %v614 = vadd.f32 %v613, %v513
        %v615 = vadd.f32 %v614, %v518
        %v616 = vadd.f32 %v615, %v521
        %v617 = vadd.f32 %v616, %v526
        %v618 = vadd.f32 %v617, %v529
        %v619 = vadd.f32 %v618, %v534
        %v620 = vadd.f32 %v619, %v537
        %v621 = vadd.f32 %v620, %v542
        %v622 = vadd.f32 %v621, %v545
        %v623 = vadd.f32 %v622, %v550
        %v624 = vadd.f32 %v623, %v553
        %v625 = vadd.f32 %v624, %v558
        %v626 = vadd.f32 %v625, %v561
        %v627 = vrot.slane %v626, 4
        %v628 = vadd.f32 %v626, %v627
        %v629 = vrot.slane %v628, 2
        %v630 = vadd.f32 %v628, %v629
        %v631 = vrot.slane %v630, 1
        %v632 = vadd.f32 %v630, %v631
        %v633 = vmul.f32 %v438, %v438
        %v634 = vmul.f32 %v441, %v441
        %v635 = vmul.f32 %v446, %v446
        %v636 = vmul.f32 %v449, %v449
        %v637 = vmul.f32 %v454, %v454
        %v638 = vmul.f32 %v457, %v457
        %v639 = vmul.f32 %v462, %v462
        %v640 = vmul.f32 %v465, %v465
        %v641 = vmul.f32 %v470, %v470
        %v642 = vmul.f32 %v473, %v473
        %v643 = vmul.f32 %v478, %v478
        %v644 = vmul.f32 %v481, %v481
        %v645 = vmul.f32 %v486, %v486
        %v646 = vmul.f32 %v489, %v489
        %v647 = vmul.f32 %v494, %v494
        %v648 = vmul.f32 %v497, %v497
        %v649 = vmul.f32 %v502, %v502
        %v650 = vmul.f32 %v505, %v505
        %v651 = vmul.f32 %v510, %v510
        %v652 = vmul.f32 %v513, %v513
        %v653 = vmul.f32 %v518, %v518
        %v654 = vmul.f32 %v521, %v521
        %v655 = vmul.f32 %v526, %v526
        %v656 = vmul.f32 %v529, %v529
        %v657 = vmul.f32 %v534, %v534
        %v658 = vmul.f32 %v537, %v537
        %v659 = vmul.f32 %v542, %v542
        %v660 = vmul.f32 %v545, %v545
        %v661 = vmul.f32 %v550, %v550
        %v662 = vmul.f32 %v553, %v553
        %v663 = vmul.f32 %v558, %v558
        %v664 = vmul.f32 %v561, %v561
        %v665 = vadd.f32 %v633, %v634
        %v666 = vadd.f32 %v665, %v635
        %v667 = vadd.f32 %v666, %v636
        %v668 = vadd.f32 %v667, %v637
        %v669 = vadd.f32 %v668, %v638
        %v670 = vadd.f32 %v669, %v639
        %v671 = vadd.f32 %v670, %v640
        %v672 = vadd.f32 %v671, %v641
        %v673 = vadd.f32 %v672, %v642
        %v674 = vadd.f32 %v673, %v643
        %v675 = vadd.f32 %v674, %v644
        %v676 = vadd.f32 %v675, %v645
        %v677 = vadd.f32 %v676, %v646
        %v678 = vadd.f32 %v677, %v647
        %v679 = vadd.f32 %v678, %v648
        %v680 = vadd.f32 %v679, %v649
        %v681 = vadd.f32 %v680, %v650
        %v682 = vadd.f32 %v681, %v651
        %v683 = vadd.f32 %v682, %v652
        %v684 = vadd.f32 %v683, %v653
        %v685 = vadd.f32 %v684, %v654
        %v686 = vadd.f32 %v685, %v655
        %v687 = vadd.f32 %v686, %v656
        %v688 = vadd.f32 %v687, %v657
        %v689 = vadd.f32 %v688, %v658
        %v690 = vadd.f32 %v689, %v659
        %v691 = vadd.f32 %v690, %v660
        %v692 = vadd.f32 %v691, %v661
        %v693 = vadd.f32 %v692, %v662
        %v694 = vadd.f32 %v693, %v663
        %v695 = vadd.f32 %v694, %v664
        %v696 = vrot.slane %v695, 4
        %v697 = vadd.f32 %v695, %v696
        %v698 = vrot.slane %v697, 2
        %v699 = vadd.f32 %v697, %v698
        %v700 = vrot.slane %v699, 1
        %v701 = vadd.f32 %v699, %v700
        %v702 = vlaneseq
        %v703 = vshrl.u32 %v702, 7
        %vm704 = vcmp.eq.s32.totalorder %v703, 0
        %vm705 = vcmp.eq.s32.totalorder %v703, 1
        %v706 = vsel %vm705, %v701, 0.0
        %v707 = vsel %vm704, %v632, %v706
        %708 = vst [vmem:[%s214] sm:$0xff] %v707
        %s709 = sand.u32 %s80, 1
        %s710 = scalar_lea.sflag [#allocation4], %s709
        %s711 = sand.u32 %s80, 1
        %s712 = smul.addr %s711, 256
        %s713 = scalar_lea.vmem [#allocation7], %s712
        %s714 = sand.u32 %s106, 1
        %s715 = scalar_lea.sflag [#allocation9], %s714
        %s716 = sand.u32 %s106, 1
        %s717 = smul.addr %s716, 8
        %s718 = scalar_lea.vmem [#allocation8], %s717
        // Predicated region
        $region37: #{basic_block_forward.4} parent=27 // pred_check
          %p719 = pneg %p90
        $region38: #{basic_block_forward.4} parent=27 // pred_check_branch
          %721 = sbr.rel (%p719) target = $region40
        $region39: #{basic_block_forward.4} parent=27 // pred_region
          %s722 = smul.u32 32, %s25
          %s724 = ssub.s32 4096, 4096
          %725 = vsyncadd %s710, %s724
          %s726 = smul.addr %s722, 128
          %s727 = scalar_lea.hbm %s2, %s726
          %s728 = sshll.u32 %s713, 4
          %s729 = int_to_ptr.vmem [resolvable:$true] %s728
          %734 = dma.vmem_to_hbm [thread:$0]  %s729, 4096, %s727, %s710, 128, 128, 8
        $region40: #{basic_block_forward.4} parent=27 // pred_fallthru
          _
        // Predicated region
        $region41: #{basic_block_forward.4} parent=27 // pred_check
          %p735 = pneg %p116
        $region42: #{basic_block_forward.4} parent=27 // pred_check_branch
          %737 = sbr.rel (%p735) target = $region44
        $region43: #{basic_block_forward.4} parent=27 // pred_region
          %s739 = ssub.s32 128, 128
          %740 = vsyncadd %s715, %s739
          %s741 = smul.addr %s25, 128
          %s742 = scalar_lea.hbm %s3, %s741
          %s744 = sshll.u32 %s718, 4
          %s745 = int_to_ptr.vmem [resolvable:$true] %s744
          %747 = dma.vmem_to_hbm [thread:$0]  %s745, 128, %s742, %s715
        $region44: #{basic_block_forward.4} parent=27 // pred_fallthru
          _
      $region28: #{basic_block_forward.4} parent=5 // pred_fallthru
        _
      %p748 = scmp.le.s32.totalorder 2, %s20
      // Predicated region
      $region45: #{basic_block_forward.4} parent=5 // pred_check
        %p749 = pneg %p748
      $region46: #{basic_block_forward.4} parent=5 // pred_check_branch
        %751 = sbr.rel (%p749) target = $region48
      $region47: #{basic_block_forward.4} parent=5 // pred_region
        %s752 = ssub.s32 %s20, 2
        // Predicated region
        $region49: #{basic_block_forward.4} parent=47 // pred_check
          %p753 = pneg %p96
        $region50: #{basic_block_forward.4} parent=47 // pred_check_branch
          %755 = sbr.rel (%p753) target = $region52
        $region51: #{basic_block_forward.4} parent=47 // pred_region
          %s756 = sand.u32 %s81, 1
          %s757 = scalar_lea.sflag [#allocation4], %s756
          %s758 = sand.u32 %s81, 1
          %s759 = smul.addr %s758, 256
          %s760 = scalar_lea.vmem [#allocation7], %s759
          %761 = dma.done %s757, 4096
        $region52: #{basic_block_forward.4} parent=47 // pred_fallthru
          _
        // Predicated region
        $region53: #{basic_block_forward.4} parent=47 // pred_check
          %p762 = pneg %p122
        $region54: #{basic_block_forward.4} parent=47 // pred_check_branch
          %764 = sbr.rel (%p762) target = $region56
        $region55: #{basic_block_forward.4} parent=47 // pred_region
          %s765 = sand.u32 %s107, 1
          %s766 = scalar_lea.sflag [#allocation9], %s765
          %s767 = sand.u32 %s107, 1
          %s768 = smul.addr %s767, 8
          %s769 = scalar_lea.vmem [#allocation8], %s768
          %770 = dma.done %s766, 128
        $region56: #{basic_block_forward.4} parent=47 // pred_fallthru
          _
      $region48: #{basic_block_forward.4} parent=5 // pred_fallthru
        _
    $region6: #{basic_block_forward.4} parent=1 // loop_footer
      %s24 = sadd.s32 1, %s20
    $region7: #{basic_block_forward.4} parent=1 // loop_footer_branch
      %19 = sbr.rel target = $region3
    $region8: #{basic_block_forward.4} parent=1 // loop_exit
      _
    %771 = vsyncpa [#allocation3], 1
    %s772 = scalar_lea.sflag [#allocation3], 1
    %773 = vsyncpa %s772, 1
    %774 = vsyncpa [#allocation6], 1
    %775 = vsyncpa [#allocation4], 1
    %s776 = scalar_lea.sflag [#allocation4], 1
    %777 = vsyncpa %s776, 1
    %778 = vsyncpa [#allocation9], 1
    %s779 = scalar_lea.sflag [#allocation9], 1
    %780 = vsyncpa %s779, 1

// kernel: basic_block_forward.7
$region0: #{basic_block_forward.7}
  #allocation0 [shape = 'u32[]', space=smem, size = 0x4, offset = 0x4, fixed_abs, tag = 'smem constant byte address 0x4 - core index']
  #allocation1 [shape = 'u32[144,128]{1,0:T(1,128)}', space=vmem, size = 0x12000, scoped, tag = 'internal scratch']
  %s0 = inlined_call_operand.hbm [shape: f32[512,128], index: 0, kind: input, shape index: {}]
  %s1 = inlined_call_operand.hbm [shape: f32[1,128], index: 1, kind: input, shape index: {}]
  %s2 = inlined_call_operand.hbm [shape: f32[1,128], index: 2, kind: input, shape index: {}]
  %s3 = inlined_call_operand.hbm [shape: f32[512,128], index: 3, kind: input, shape index: {}]
  %s4 = inlined_call_operand.hbm [shape: f32[512,128], index: 4, kind: output, shape index: {}]
  %s5 = sld [smem:[#allocation0]]
  $region65: #{basic_block_forward.7} parent=0
    _
  %s7 = ssub.s32 1, %s5
  %s8 = scalar_select 0, %s7, %s5
  $region1: #{basic_block_forward.7} parent=0
    #allocation2 [shape = 'u8[262144]{0}', space=vmem, size = 0x40000, scoped, tag = 'input window, operand 0']
    #allocation3 [shape = 's32[2]{0}', space=sflag, size = 0x8, scoped, tag = 'scoped memory for basic_block_forward.7']
    #allocation4 [shape = 's32[2]{0}', space=sflag, size = 0x8, scoped, tag = 'scoped memory for basic_block_forward.7']
    #allocation5 [shape = 'u8[512]{0}', space=vmem, size = 0x400, scoped, tag = 'input window, operand 1, single buffered']
    #allocation6 [shape = 's32[1]{0}', space=sflag, size = 0x4, scoped, tag = 'scoped memory for basic_block_forward.7']
    #allocation7 [shape = 'u8[512]{0}', space=vmem, size = 0x400, scoped, tag = 'input window, operand 2, single buffered']
    #allocation8 [shape = 'u8[262144]{0}', space=vmem, size = 0x40000, scoped, tag = 'input window, operand 3']
    #allocation9 [shape = 's32[2]{0}', space=sflag, size = 0x8, scoped, tag = 'scoped memory for basic_block_forward.7']
    #allocation10 [shape = 'u8[262144]{0}', space=vmem, size = 0x40000, scoped, tag = 'output window, operand 0']
    %9 = vsyncpa [#allocation3], 0
    %s10 = scalar_lea.sflag [#allocation3], 1
    %11 = vsyncpa %s10, 0
    %12 = vsyncpa [#allocation6], 0
    %13 = vsyncpa [#allocation9], 0
    %s14 = scalar_lea.sflag [#allocation9], 1
    %15 = vsyncpa %s14, 0
    %16 = vsyncpa [#allocation4], 0
    %s17 = scalar_lea.sflag [#allocation4], 1
    %18 = vsyncpa %s17, 0
    loop: start=0, step=1, limit=4
    $region2: #{basic_block_forward.7} parent=1 // loop_pre_header
      _
    $region3: #{basic_block_forward.7} parent=1 // loop_header
      %s20 = sphi 0, %s24
      %p21 = scmp.ge.s32.totalorder %s20, 4
      %s30 = sphi 0, %s32
      %s33 = sphi 0, %s30
      %s34 = sphi 0, %s33
      %s50 = sphi 0, %s34
      %s54 = sphi 0, %s54
      %s56 = sphi 0, %s54
      %s57 = sphi 0, %s56
      %s71 = sphi 0, %s57
      %s75 = sphi 0, %s75
      %s77 = sphi 0, %s75
      %s78 = sphi 0, %s77
      %s92 = sphi 0, %s78
      %s98 = sphi 0, %s100
      %s101 = sphi 0, %s98
      %s102 = sphi 0, %s101
      %s118 = sphi 0, %s102
      %s124 = sphi 0, %s126
      %s127 = sphi 0, %s124
      %s128 = sphi 0, %s127
      %s144 = sphi 0, %s128
    $region4: #{basic_block_forward.7} parent=1 // loop_header_branch
      %23 = sbr.rel (%p21) target = $region8
    $region5: #{basic_block_forward.7} parent=1 // loop_body
      %s25 = ssub.s32 %s20, 1
      %s26 = ssub.s32 %s20, 2
      %s27 = sadd.s32 %s20, 1
      %s28 = ssub.s32 %s20, %s27
      %p29 = scmp.eq.s32.totalorder %s28, 0
      %s31 = sadd.s32 %s30, 1
      %s32 = scalar_select %p29, %s30, %s31
      %p35 = pneg %p29
      %p36 = scmp.eq.s32.totalorder %s20, 1
      %p37 = por %p35, %p36
      %p38 = scmp.ne.s32.totalorder %s30, %s33
      %p39 = scmp.eq.s32.totalorder %s20, 0
      %p40 = por %p38, %p39
      %p41 = scmp.ne.s32.totalorder %s30, %s33
      %p42 = scmp.eq.s32.totalorder %s25, 1
      %p43 = por %p41, %p42
      %p44 = scmp.ne.s32.totalorder %s33, %s34
      %p45 = scmp.eq.s32.totalorder %s25, 0
      %p46 = por %p44, %p45
      %p47 = scmp.ne.s32.totalorder %s33, %s34
      %p48 = scmp.eq.s32.totalorder %s26, 1
      %p49 = por %p47, %p48
      %p51 = scmp.ne.s32.totalorder %s34, %s50
      %p52 = scmp.eq.s32.totalorder %s26, 0
      %p53 = por %p51, %p52
      %s55 = sadd.s32 %s54, 1
      %p58 = scmp.eq.s32.totalorder %s20, 1
      %p59 = scmp.ne.s32.totalorder %s54, %s56
      %p60 = scmp.eq.s32.totalorder %s20, 0
      %p61 = por %p59, %p60
      %p62 = scmp.ne.s32.totalorder %s54, %s56
      %p63 = scmp.eq.s32.totalorder %s25, 1
      %p64 = por %p62, %p63
      %p65 = scmp.ne.s32.totalorder %s56, %s57
      %p66 = scmp.eq.s32.totalorder %s25, 0
      %p67 = por %p65, %p66
      %p68 = scmp.ne.s32.totalorder %s56, %s57
      %p69 = scmp.eq.s32.totalorder %s26, 1
      %p70 = por %p68, %p69
      %p72 = scmp.ne.s32.totalorder %s57, %s71
      %p73 = scmp.eq.s32.totalorder %s26, 0
      %p74 = por %p72, %p73
      %s76 = sadd.s32 %s75, 1
      %p79 = scmp.eq.s32.totalorder %s20, 1
      %p80 = scmp.ne.s32.totalorder %s75, %s77
      %p81 = scmp.eq.s32.totalorder %s20, 0
      %p82 = por %p80, %p81
      %p83 = scmp.ne.s32.totalorder %s75, %s77
      %p84 = scmp.eq.s32.totalorder %s25, 1
      %p85 = por %p83, %p84
      %p86 = scmp.ne.s32.totalorder %s77, %s78
      %p87 = scmp.eq.s32.totalorder %s25, 0
      %p88 = por %p86, %p87
      %p89 = scmp.ne.s32.totalorder %s77, %s78
      %p90 = scmp.eq.s32.totalorder %s26, 1
      %p91 = por %p89, %p90
      %p93 = scmp.ne.s32.totalorder %s78, %s92
      %p94 = scmp.eq.s32.totalorder %s26, 0
      %p95 = por %p93, %p94
      %s96 = ssub.s32 %s20, %s27
      %p97 = scmp.eq.s32.totalorder %s96, 0
      %s99 = sadd.s32 %s98, 1
      %s100 = scalar_select %p97, %s98, %s99
      %p103 = pneg %p97
      %p104 = scmp.eq.s32.totalorder %s20, 1
      %p105 = por %p103, %p104
      %p106 = scmp.ne.s32.totalorder %s98, %s101
      %p107 = scmp.eq.s32.totalorder %s20, 0
      %p108 = por %p106, %p107
      %p109 = scmp.ne.s32.totalorder %s98, %s101
      %p110 = scmp.eq.s32.totalorder %s25, 1
      %p111 = por %p109, %p110
      %p112 = scmp.ne.s32.totalorder %s101, %s102
      %p113 = scmp.eq.s32.totalorder %s25, 0
      %p114 = por %p112, %p113
      %p115 = scmp.ne.s32.totalorder %s101, %s102
      %p116 = scmp.eq.s32.totalorder %s26, 1
      %p117 = por %p115, %p116
      %p119 = scmp.ne.s32.totalorder %s102, %s118
      %p120 = scmp.eq.s32.totalorder %s26, 0
      %p121 = por %p119, %p120
      %s122 = ssub.s32 %s20, %s27
      %p123 = scmp.eq.s32.totalorder %s122, 0
      %s125 = sadd.s32 %s124, 1
      %s126 = scalar_select %p123, %s124, %s125
      %p129 = pneg %p123
      %p130 = scmp.eq.s32.totalorder %s20, 1
      %p131 = por %p129, %p130
      %p132 = scmp.ne.s32.totalorder %s124, %s127
      %p133 = scmp.eq.s32.totalorder %s20, 0
      %p134 = por %p132, %p133
      %p135 = scmp.ne.s32.totalorder %s124, %s127
      %p136 = scmp.eq.s32.totalorder %s25, 1
      %p137 = por %p135, %p136
      %p138 = scmp.ne.s32.totalorder %s127, %s128
      %p139 = scmp.eq.s32.totalorder %s25, 0
      %p140 = por %p138, %p139
      %p141 = scmp.ne.s32.totalorder %s127, %s128
      %p142 = scmp.eq.s32.totalorder %s26, 1
      %p143 = por %p141, %p142
      %p145 = scmp.ne.s32.totalorder %s128, %s144
      %p146 = scmp.eq.s32.totalorder %s26, 0
      %p147 = por %p145, %p146
      %p148 = scmp.le.s32.totalorder 1, %s20
      %p149 = scmp.lt.s32.totalorder %s20, 3
      %p150 = pnand %p148, %p149
      %p151 = pneg %p150
      // Predicated region
      $region9: #{basic_block_forward.7} parent=5 // pred_check
        _
      $region10: #{basic_block_forward.7} parent=5 // pred_check_branch
        %153 = sbr.rel (%p150) target = $region12
      $region11: #{basic_block_forward.7} parent=5 // pred_region
        %s154 = ssub.s32 %s20, 1
        // Predicated region
        $region13: #{basic_block_forward.7} parent=11 // pred_check
          %p155 = pneg %p67
        $region14: #{basic_block_forward.7} parent=11 // pred_check_branch
          %157 = sbr.rel (%p155) target = $region16
        $region15: #{basic_block_forward.7} parent=11 // pred_region
          %s159 = ssub.s32 16, 16
          %160 = vsyncadd [#allocation6], %s159
          %s162 = sshll.u32 [#allocation5], 4
          %s163 = int_to_ptr.vmem [resolvable:$true] %s162
          %165 = dma.hbm_to_vmem [thread:$0]  %s1, 16, %s163, [#allocation6]
        $region16: #{basic_block_forward.7} parent=11 // pred_fallthru
          _
        // Predicated region
        $region17: #{basic_block_forward.7} parent=11 // pred_check
          %p166 = pneg %p88
        $region18: #{basic_block_forward.7} parent=11 // pred_check_branch
          %168 = sbr.rel (%p166) target = $region20
        $region19: #{basic_block_forward.7} parent=11 // pred_region
          %s170 = ssub.s32 16, 16
          %171 = vsyncadd [#allocation6], %s170
          %s173 = sshll.u32 [#allocation7], 4
          %s174 = int_to_ptr.vmem [resolvable:$true] %s173
          %176 = dma.hbm_to_vmem [thread:$0]  %s2, 16, %s174, [#allocation6]
        $region20: #{basic_block_forward.7} parent=11 // pred_fallthru
          _
      $region12: #{basic_block_forward.7} parent=5 // pred_fallthru
        _
      %p177 = scmp.lt.s32.totalorder %s20, 2
      // Predicated region
      $region21: #{basic_block_forward.7} parent=5 // pred_check
        %p178 = pneg %p177
      $region22: #{basic_block_forward.7} parent=5 // pred_check_branch
        %180 = sbr.rel (%p178) target = $region24
      $region23: #{basic_block_forward.7} parent=5 // pred_region
        // Predicated region
        $region25: #{basic_block_forward.7} parent=23 // pred_check
          %p181 = pneg %p40
        $region26: #{basic_block_forward.7} parent=23 // pred_check_branch
          %183 = sbr.rel (%p181) target = $region28
        $region27: #{basic_block_forward.7} parent=23 // pred_region
          %s184 = sand.u32 %s30, 1
          %s185 = scalar_lea.sflag [#allocation3], %s184
          %s186 = sand.u32 %s30, 1
          %s187 = smul.addr %s186, 256
          %s188 = scalar_lea.vmem [#allocation2], %s187
          %s189 = smul.u32 32, %s20
          %s191 = ssub.s32 4096, 4096
          %192 = vsyncadd %s185, %s191
          %s193 = smul.addr %s189, 128
          %s194 = scalar_lea.hbm %s0, %s193
          %s195 = sshll.u32 %s188, 4
          %s196 = int_to_ptr.vmem [resolvable:$true] %s195
          %201 = dma.hbm_to_vmem [thread:$0]  %s194, 4096, %s196, %s185, 128, 128, 8
        $region28: #{basic_block_forward.7} parent=23 // pred_fallthru
          _
        // Predicated region
        $region29: #{basic_block_forward.7} parent=23 // pred_check
          %p202 = pneg %p108
        $region30: #{basic_block_forward.7} parent=23 // pred_check_branch
          %204 = sbr.rel (%p202) target = $region32
        $region31: #{basic_block_forward.7} parent=23 // pred_region
          %s205 = sand.u32 %s98, 1
          %s206 = scalar_lea.sflag [#allocation9], %s205
          %s207 = sand.u32 %s98, 1
          %s208 = smul.addr %s207, 256
          %s209 = scalar_lea.vmem [#allocation8], %s208
          %s210 = smul.u32 32, %s20
          %s212 = ssub.s32 4096, 4096
          %213 = vsyncadd %s206, %s212
          %s214 = smul.addr %s210, 128
          %s215 = scalar_lea.hbm %s3, %s214
          %s216 = sshll.u32 %s209, 4
          %s217 = int_to_ptr.vmem [resolvable:$true] %s216
          %222 = dma.hbm_to_vmem [thread:$0]  %s215, 4096, %s217, %s206, 128, 128, 8
        $region32: #{basic_block_forward.7} parent=23 // pred_fallthru
          _
      $region24: #{basic_block_forward.7} parent=5 // pred_fallthru
        _
      %p223 = scmp.le.s32.totalorder 1, %s20
      %p224 = scmp.lt.s32.totalorder %s20, 3
      %p225 = pnand %p223, %p224
      %p226 = pneg %p225
      // Predicated region
      $region33: #{basic_block_forward.7} parent=5 // pred_check
        _
      $region34: #{basic_block_forward.7} parent=5 // pred_check_branch
        %228 = sbr.rel (%p225) target = $region36
      $region35: #{basic_block_forward.7} parent=5 // pred_region
        %s229 = ssub.s32 %s20, 1
        %s230 = sand.u32 %s33, 1
        %s231 = scalar_lea.sflag [#allocation3], %s230
        %s232 = sand.u32 %s33, 1
        %s233 = smul.addr %s232, 256
        %s234 = scalar_lea.vmem [#allocation2], %s233
        // Predicated region
        $region37: #{basic_block_forward.7} parent=35 // pred_check
          %p235 = pneg %p46
        $region38: #{basic_block_forward.7} parent=35 // pred_check_branch
          %237 = sbr.rel (%p235) target = $region40
        $region39: #{basic_block_forward.7} parent=35 // pred_region
          %238 = dma.done %s231, 4096
        $region40: #{basic_block_forward.7} parent=35 // pred_fallthru
          _
        // Predicated region
        $region41: #{basic_block_forward.7} parent=35 // pred_check
          %p239 = pneg %p67
        $region42: #{basic_block_forward.7} parent=35 // pred_check_branch
          %241 = sbr.rel (%p239) target = $region44
        $region43: #{basic_block_forward.7} parent=35 // pred_region
          %242 = dma.done [#allocation6], 16
        $region44: #{basic_block_forward.7} parent=35 // pred_fallthru
          _
        // Predicated region
        $region45: #{basic_block_forward.7} parent=35 // pred_check
          %p243 = pneg %p88
        $region46: #{basic_block_forward.7} parent=35 // pred_check_branch
          %245 = sbr.rel (%p243) target = $region48
        $region47: #{basic_block_forward.7} parent=35 // pred_region
          %246 = dma.done [#allocation6], 16
        $region48: #{basic_block_forward.7} parent=35 // pred_fallthru
          _
        %s247 = sand.u32 %s101, 1
        %s248 = scalar_lea.sflag [#allocation9], %s247
        %s249 = sand.u32 %s101, 1
        %s250 = smul.addr %s249, 256
        %s251 = scalar_lea.vmem [#allocation8], %s250
        // Predicated region
        $region49: #{basic_block_forward.7} parent=35 // pred_check
          %p252 = pneg %p114
        $region50: #{basic_block_forward.7} parent=35 // pred_check_branch
          %254 = sbr.rel (%p252) target = $region52
        $region51: #{basic_block_forward.7} parent=35 // pred_region
          %255 = dma.done %s248, 4096
        $region52: #{basic_block_forward.7} parent=35 // pred_fallthru
          _
        %s256 = sand.u32 %s33, 1
        %s257 = scalar_lea.sflag [#allocation3], %s256
        %s258 = sand.u32 %s33, 1
        %s259 = smul.addr %s258, 256
        %s260 = scalar_lea.vmem [#allocation2], %s259
        %p261 = pneg %p46
        %p262 = pneg %p43
        %p263 = pneg %p67
        %p264 = pneg %p64
        %p265 = pneg %p88
        %p266 = pneg %p85
        %s267 = sand.u32 %s101, 1
        %s268 = scalar_lea.sflag [#allocation9], %s267
        %s269 = sand.u32 %s101, 1
        %s270 = smul.addr %s269, 256
        %s271 = scalar_lea.vmem [#allocation8], %s270
        %p272 = pneg %p114
        %p273 = pneg %p111
        %p274 = pneg %p140
        %p275 = pneg %p137
        %s276 = sand.u32 %s127, 1
        %s277 = scalar_lea.sflag [#allocation4], %s276
        %s278 = sand.u32 %s127, 1
        %s279 = smul.addr %s278, 256
        %s280 = scalar_lea.vmem [#allocation10], %s279
        %s281 = smul.u32 32, %s25
        %s282 = smul.u32 32, %s25
        %s283 = smul.u32 32, %s25
        %v284 = vld [vmem:[%s234] sm:$0xff]
        %v285 = vld [vmem:[%s234 + $0x8] sm:$0xff]
        %v286 = vld [vmem:[%s234 + $0x10] sm:$0xff]
        %v287 = vld [vmem:[%s234 + $0x18] sm:$0xff]
        %v288 = vld [vmem:[%s234 + $0x20] sm:$0xff]
        %v289 = vld [vmem:[%s234 + $0x28] sm:$0xff]
        %v290 = vld [vmem:[%s234 + $0x30] sm:$0xff]
        %v291 = vld [vmem:[%s234 + $0x38] sm:$0xff]
        %v292 = vld [vmem:[%s234 + $0x40] sm:$0xff]
        %v293 = vld [vmem:[%s234 + $0x48] sm:$0xff]
        %v294 = vld [vmem:[%s234 + $0x50] sm:$0xff]
        %v295 = vld [vmem:[%s234 + $0x58] sm:$0xff]
        %v296 = vld [vmem:[%s234 + $0x60] sm:$0xff]
        %v297 = vld [vmem:[%s234 + $0x68] sm:$0xff]
        %v298 = vld [vmem:[%s234 + $0x70] sm:$0xff]
        %v299 = vld [vmem:[%s234 + $0x78] sm:$0xff]
        %v300 = vld [vmem:[%s234 + $0x80] sm:$0xff]
        %v301 = vld [vmem:[%s234 + $0x88] sm:$0xff]
        %v302 = vld [vmem:[%s234 + $0x90] sm:$0xff]
        %v303 = vld [vmem:[%s234 + $0x98] sm:$0xff]
        %v304 = vld [vmem:[%s234 + $0xa0] sm:$0xff]
        %v305 = vld [vmem:[%s234 + $0xa8] sm:$0xff]
        %v306 = vld [vmem:[%s234 + $0xb0] sm:$0xff]
        %v307 = vld [vmem:[%s234 + $0xb8] sm:$0xff]
        %v308 = vld [vmem:[%s234 + $0xc0] sm:$0xff]
        %v309 = vld [vmem:[%s234 + $0xc8] sm:$0xff]
        %v310 = vld [vmem:[%s234 + $0xd0] sm:$0xff]
        %v311 = vld [vmem:[%s234 + $0xd8] sm:$0xff]
        %v312 = vld [vmem:[%s234 + $0xe0] sm:$0xff]
        %v313 = vld [vmem:[%s234 + $0xe8] sm:$0xff]
        %v314 = vld [vmem:[%s234 + $0xf0] sm:$0xff]
        %v315 = vld [vmem:[%s234 + $0xf8] sm:$0xff]
        %v316 = vld [vmem:[#allocation5] sm:$0x1]
        %v318 = vlaneseq
        %v319 = vshrl.u32 %v318, 7
        %v320 = vsub.s32 0, %v319
        %v321 = vrot.slane %v316, %v320
        %v323 = vmul.f32 %v284, %v321
        %v324 = vmul.f32 %v285, %v321
        %v325 = vmul.f32 %v286, %v321
        %v326 = vmul.f32 %v287, %v321
        %v327 = vmul.f32 %v288, %v321
        %v328 = vmul.f32 %v289, %v321
        %v329 = vmul.f32 %v290, %v321
        %v330 = vmul.f32 %v291, %v321
        %v331 = vmul.f32 %v292, %v321
        %v332 = vmul.f32 %v293, %v321
        %v333 = vmul.f32 %v294, %v321
        %v334 = vmul.f32 %v295, %v321
        %v335 = vmul.f32 %v296, %v321
        %v336 = vmul.f32 %v297, %v321
        %v337 = vmul.f32 %v298, %v321
        %v338 = vmul.f32 %v299, %v321
        %v339 = vmul.f32 %v300, %v321
        %v340 = vmul.f32 %v301, %v321
        %v341 = vmul.f32 %v302, %v321
        %v342 = vmul.f32 %v303, %v321
        %v343 = vmul.f32 %v304, %v321
        %v344 = vmul.f32 %v305, %v321
        %v345 = vmul.f32 %v306, %v321
        %v346 = vmul.f32 %v307, %v321
        %v347 = vmul.f32 %v308, %v321
        %v348 = vmul.f32 %v309, %v321
        %v349 = vmul.f32 %v310, %v321
        %v350 = vmul.f32 %v311, %v321
        %v351 = vmul.f32 %v312, %v321
        %v352 = vmul.f32 %v313, %v321
        %v353 = vmul.f32 %v314, %v321
        %v354 = vmul.f32 %v315, %v321
        %v355 = vld [vmem:[#allocation7] sm:$0x1]
        %v357 = vlaneseq
        %v358 = vshrl.u32 %v357, 7
        %v359 = vsub.s32 0, %v358
        %v360 = vrot.slane %v355, %v359
        %v362 = vadd.f32 %v323, %v360
        %v363 = vadd.f32 %v324, %v360
        %v364 = vadd.f32 %v325, %v360
        %v365 = vadd.f32 %v326, %v360
        %v366 = vadd.f32 %v327, %v360
        %v367 = vadd.f32 %v328, %v360
        %v368 = vadd.f32 %v329, %v360
        %v369 = vadd.f32 %v330, %v360
        %v370 = vadd.f32 %v331, %v360
        %v371 = vadd.f32 %v332, %v360
        %v372 = vadd.f32 %v333, %v360
        %v373 = vadd.f32 %v334, %v360
        %v374 = vadd.f32 %v335, %v360
        %v375 = vadd.f32 %v336, %v360
        %v376 = vadd.f32 %v337, %v360
        %v377 = vadd.f32 %v338, %v360
        %v378 = vadd.f32 %v339, %v360
        %v379 = vadd.f32 %v340, %v360
        %v380 = vadd.f32 %v341, %v360
        %v381 = vadd.f32 %v342, %v360
        %v382 = vadd.f32 %v343, %v360
        %v383 = vadd.f32 %v344, %v360
        %v384 = vadd.f32 %v345, %v360
        %v385 = vadd.f32 %v346, %v360
        %v386 = vadd.f32 %v347, %v360
        %v387 = vadd.f32 %v348, %v360
        %v388 = vadd.f32 %v349, %v360
        %v389 = vadd.f32 %v350, %v360
        %v390 = vadd.f32 %v351, %v360
        %v391 = vadd.f32 %v352, %v360
        %v392 = vadd.f32 %v353, %v360
        %v393 = vadd.f32 %v354, %v360
        %v394 = vld [vmem:[%s251] sm:$0xff]
        %v395 = vld [vmem:[%s251 + $0x8] sm:$0xff]
        %v396 = vld [vmem:[%s251 + $0x10] sm:$0xff]
        %v397 = vld [vmem:[%s251 + $0x18] sm:$0xff]
        %v398 = vld [vmem:[%s251 + $0x20] sm:$0xff]
        %v399 = vld [vmem:[%s251 + $0x28] sm:$0xff]
        %v400 = vld [vmem:[%s251 + $0x30] sm:$0xff]
        %v401 = vld [vmem:[%s251 + $0x38] sm:$0xff]
        %v402 = vld [vmem:[%s251 + $0x40] sm:$0xff]
        %v403 = vld [vmem:[%s251 + $0x48] sm:$0xff]
        %v404 = vld [vmem:[%s251 + $0x50] sm:$0xff]
        %v405 = vld [vmem:[%s251 + $0x58] sm:$0xff]
        %v406 = vld [vmem:[%s251 + $0x60] sm:$0xff]
        %v407 = vld [vmem:[%s251 + $0x68] sm:$0xff]
        %v408 = vld [vmem:[%s251 + $0x70] sm:$0xff]
        %v409 = vld [vmem:[%s251 + $0x78] sm:$0xff]
        %v410 = vld [vmem:[%s251 + $0x80] sm:$0xff]
        %v411 = vld [vmem:[%s251 + $0x88] sm:$0xff]
        %v412 = vld [vmem:[%s251 + $0x90] sm:$0xff]
        %v413 = vld [vmem:[%s251 + $0x98] sm:$0xff]
        %v414 = vld [vmem:[%s251 + $0xa0] sm:$0xff]
        %v415 = vld [vmem:[%s251 + $0xa8] sm:$0xff]
        %v416 = vld [vmem:[%s251 + $0xb0] sm:$0xff]
        %v417 = vld [vmem:[%s251 + $0xb8] sm:$0xff]
        %v418 = vld [vmem:[%s251 + $0xc0] sm:$0xff]
        %v419 = vld [vmem:[%s251 + $0xc8] sm:$0xff]
        %v420 = vld [vmem:[%s251 + $0xd0] sm:$0xff]
        %v421 = vld [vmem:[%s251 + $0xd8] sm:$0xff]
        %v422 = vld [vmem:[%s251 + $0xe0] sm:$0xff]
        %v423 = vld [vmem:[%s251 + $0xe8] sm:$0xff]
        %v424 = vld [vmem:[%s251 + $0xf0] sm:$0xff]
        %v425 = vld [vmem:[%s251 + $0xf8] sm:$0xff]
        %v426 = vadd.f32 %v362, %v394
        %v427 = vadd.f32 %v363, %v395
        %v428 = vadd.f32 %v364, %v396
        %v429 = vadd.f32 %v365, %v397
        %v430 = vadd.f32 %v366, %v398
        %v431 = vadd.f32 %v367, %v399
        %v432 = vadd.f32 %v368, %v400
        %v433 = vadd.f32 %v369, %v401
        %v434 = vadd.f32 %v370, %v402
        %v435 = vadd.f32 %v371, %v403
        %v436 = vadd.f32 %v372, %v404
        %v437 = vadd.f32 %v373, %v405
        %v438 = vadd.f32 %v374, %v406
        %v439 = vadd.f32 %v375, %v407
        %v440 = vadd.f32 %v376, %v408
        %v441 = vadd.f32 %v377, %v409
        %v442 = vadd.f32 %v378, %v410
        %v443 = vadd.f32 %v379, %v411
        %v444 = vadd.f32 %v380, %v412
        %v445 = vadd.f32 %v381, %v413
        %v446 = vadd.f32 %v382, %v414
        %v447 = vadd.f32 %v383, %v415
        %v448 = vadd.f32 %v384, %v416
        %v449 = vadd.f32 %v385, %v417
        %v450 = vadd.f32 %v386, %v418
        %v451 = vadd.f32 %v387, %v419
        %v452 = vadd.f32 %v388, %v420
        %v453 = vadd.f32 %v389, %v421
        %v454 = vadd.f32 %v390, %v422
        %v455 = vadd.f32 %v391, %v423
        %v456 = vadd.f32 %v392, %v424
        %v457 = vadd.f32 %v393, %v425
        %v458 = vmax.f32 %v426, 0.0
        %v459 = vmax.f32 %v427, 0.0
        %v460 = vmax.f32 %v428, 0.0
        %v461 = vmax.f32 %v429, 0.0
        %v462 = vmax.f32 %v430, 0.0
        %v463 = vmax.f32 %v431, 0.0
        %v464 = vmax.f32 %v432, 0.0
        %v465 = vmax.f32 %v433, 0.0
        %v466 = vmax.f32 %v434, 0.0
        %v467 = vmax.f32 %v435, 0.0
        %v468 = vmax.f32 %v436, 0.0
        %v469 = vmax.f32 %v437, 0.0
        %v470 = vmax.f32 %v438, 0.0
        %v471 = vmax.f32 %v439, 0.0
        %v472 = vmax.f32 %v440, 0.0
        %v473 = vmax.f32 %v441, 0.0
        %v474 = vmax.f32 %v442, 0.0
        %v475 = vmax.f32 %v443, 0.0
        %v476 = vmax.f32 %v444, 0.0
        %v477 = vmax.f32 %v445, 0.0
        %v478 = vmax.f32 %v446, 0.0
        %v479 = vmax.f32 %v447, 0.0
        %v480 = vmax.f32 %v448, 0.0
        %v481 = vmax.f32 %v449, 0.0
        %v482 = vmax.f32 %v450, 0.0
        %v483 = vmax.f32 %v451, 0.0
        %v484 = vmax.f32 %v452, 0.0
        %v485 = vmax.f32 %v453, 0.0
        %v486 = vmax.f32 %v454, 0.0
        %v487 = vmax.f32 %v455, 0.0
        %v488 = vmax.f32 %v456, 0.0
        %v489 = vmax.f32 %v457, 0.0
        %490 = vst [vmem:[%s280] sm:$0xff] %v458
        %491 = vst [vmem:[%s280 + $0x8] sm:$0xff] %v459
        %492 = vst [vmem:[%s280 + $0x10] sm:$0xff] %v460
        %493 = vst [vmem:[%s280 + $0x18] sm:$0xff] %v461
        %494 = vst [vmem:[%s280 + $0x20] sm:$0xff] %v462
        %495 = vst [vmem:[%s280 + $0x28] sm:$0xff] %v463
        %496 = vst [vmem:[%s280 + $0x30] sm:$0xff] %v464
        %497 = vst [vmem:[%s280 + $0x38] sm:$0xff] %v465
        %498 = vst [vmem:[%s280 + $0x40] sm:$0xff] %v466
        %499 = vst [vmem:[%s280 + $0x48] sm:$0xff] %v467
        %500 = vst [vmem:[%s280 + $0x50] sm:$0xff] %v468
        %501 = vst [vmem:[%s280 + $0x58] sm:$0xff] %v469
        %502 = vst [vmem:[%s280 + $0x60] sm:$0xff] %v470
        %503 = vst [vmem:[%s280 + $0x68] sm:$0xff] %v471
        %504 = vst [vmem:[%s280 + $0x70] sm:$0xff] %v472
        %505 = vst [vmem:[%s280 + $0x78] sm:$0xff] %v473
        %506 = vst [vmem:[%s280 + $0x80] sm:$0xff] %v474
        %507 = vst [vmem:[%s280 + $0x88] sm:$0xff] %v475
        %508 = vst [vmem:[%s280 + $0x90] sm:$0xff] %v476
        %509 = vst [vmem:[%s280 + $0x98] sm:$0xff] %v477
        %510 = vst [vmem:[%s280 + $0xa0] sm:$0xff] %v478
        %511 = vst [vmem:[%s280 + $0xa8] sm:$0xff] %v479
        %512 = vst [vmem:[%s280 + $0xb0] sm:$0xff] %v480
        %513 = vst [vmem:[%s280 + $0xb8] sm:$0xff] %v481
        %514 = vst [vmem:[%s280 + $0xc0] sm:$0xff] %v482
        %515 = vst [vmem:[%s280 + $0xc8] sm:$0xff] %v483
        %516 = vst [vmem:[%s280 + $0xd0] sm:$0xff] %v484
        %517 = vst [vmem:[%s280 + $0xd8] sm:$0xff] %v485
        %518 = vst [vmem:[%s280 + $0xe0] sm:$0xff] %v486
        %519 = vst [vmem:[%s280 + $0xe8] sm:$0xff] %v487
        %520 = vst [vmem:[%s280 + $0xf0] sm:$0xff] %v488
        %521 = vst [vmem:[%s280 + $0xf8] sm:$0xff] %v489
        %s522 = sand.u32 %s127, 1
        %s523 = scalar_lea.sflag [#allocation4], %s522
        %s524 = sand.u32 %s127, 1
        %s525 = smul.addr %s524, 256
        %s526 = scalar_lea.vmem [#allocation10], %s525
        // Predicated region
        $region53: #{basic_block_forward.7} parent=35 // pred_check
          %p527 = pneg %p137
        $region54: #{basic_block_forward.7} parent=35 // pred_check_branch
          %529 = sbr.rel (%p527) target = $region56
        $region55: #{basic_block_forward.7} parent=35 // pred_region
          %s530 = smul.u32 32, %s25
          %s532 = ssub.s32 4096, 4096
          %533 = vsyncadd %s523, %s532
          %s534 = smul.addr %s530, 128
          %s535 = scalar_lea.hbm %s4, %s534
          %s536 = sshll.u32 %s526, 4
          %s537 = int_to_ptr.vmem [resolvable:$true] %s536
          %542 = dma.vmem_to_hbm [thread:$0]  %s537, 4096, %s535, %s523, 128, 128, 8
        $region56: #{basic_block_forward.7} parent=35 // pred_fallthru
          _
      $region36: #{basic_block_forward.7} parent=5 // pred_fallthru
        _
      %p543 = scmp.le.s32.totalorder 2, %s20
      // Predicated region
      $region57: #{basic_block_forward.7} parent=5 // pred_check
        %p544 = pneg %p543
      $region58: #{basic_block_forward.7} parent=5 // pred_check_branch
        %546 = sbr.rel (%p544) target = $region60
      $region59: #{basic_block_forward.7} parent=5 // pred_region
        %s547 = ssub.s32 %s20, 2
        // Predicated region
        $region61: #{basic_block_forward.7} parent=59 // pred_check
          %p548 = pneg %p143
        $region62: #{basic_block_forward.7} parent=59 // pred_check_branch
          %550 = sbr.rel (%p548) target = $region64
        $region63: #{basic_block_forward.7} parent=59 // pred_region
          %s551 = sand.u32 %s128, 1
          %s552 = scalar_lea.sflag [#allocation4], %s551
          %s553 = sand.u32 %s128, 1
          %s554 = smul.addr %s553, 256
          %s555 = scalar_lea.vmem [#allocation10], %s554
          %556 = dma.done %s552, 4096
        $region64: #{basic_block_forward.7} parent=59 // pred_fallthru
          _
      $region60: #{basic_block_forward.7} parent=5 // pred_fallthru
        _
    $region6: #{basic_block_forward.7} parent=1 // loop_footer
      %s24 = sadd.s32 1, %s20
    $region7: #{basic_block_forward.7} parent=1 // loop_footer_branch
      %19 = sbr.rel target = $region3
    $region8: #{basic_block_forward.7} parent=1 // loop_exit
      _
    %557 = vsyncpa [#allocation3], 1
    %s558 = scalar_lea.sflag [#allocation3], 1
    %559 = vsyncpa %s558, 1
    %560 = vsyncpa [#allocation6], 1
    %561 = vsyncpa [#allocation9], 1
    %s562 = scalar_lea.sflag [#allocation9], 1
    %563 = vsyncpa %s562, 1
    %564 = vsyncpa [#allocation4], 1
    %s565 = scalar_lea.sflag [#allocation4], 1
    %566 = vsyncpa %s565, 1

</llo_original>
